<compile_context>
chip_gen: v6e
topology: v6e:2x2x1
jax: 0.10.0
libtpu: 0.0.40
codegen_flags: <defaults>
</compile_context>

<pallas_src>
import jax
import jax.numpy as jnp
from jax import lax
from jax.experimental import pallas as pl
from jax.experimental.pallas import tpu as pltpu

_LANE = 128
_GIN_EPS = 0.0            # GINConv default (train_eps=False)
_BN_EPS = 1e-5            # BatchNorm1d default
_X_RESIDENT_BYTES = 24 << 20   # full-x VMEM residency budget (safe on v7x 64 MiB)


def _round_up(v, m):
    return ((v + m - 1) // m) * m


def _pad2(a, rows, cols, dtype=None):
    dtype = a.dtype if dtype is None else dtype
    out = jnp.zeros((rows, cols), dtype)
    return out.at[: a.shape[0], : a.shape[1]].set(a.astype(dtype))


def _make_gin_layer_kernel(*, tk, x_resident, num_valid_classes=None):
    """One GIN layer: acc = Â @ x (tiled over k) + fused MLP/ReLU/BN epilogue.

    If num_valid_classes is given, also emits log_softmax masked to the first
    num_valid_classes lanes (class axis is zero-padded to 128).
    """
    emit_logp = num_valid_classes is not None

    def kernel(a_ref, x_ref, w1_ref, b1_ref, w2_ref, b2_ref,
               bn_scale_ref, bn_shift_ref, *rest):
        if emit_logp:
            out_ref, logp_ref, acc_ref = rest
        else:
            out_ref, acc_ref = rest

        k = pl.program_id(1)

        @pl.when(k == 0)
        def _():
            acc_ref[...] = jnp.zeros_like(acc_ref)

        # Aggregation: Â tile (bf16) @ x chunk (bf16), f32 accumulation.
        if x_resident:
            start = pl.multiple_of(k * tk, tk)
            x_blk = x_ref[pl.ds(start, tk), :]       # x fully resident in VMEM
        else:
            x_blk = x_ref[...]                       # streamed bf16 (tk, F) tile
        acc_ref[...] += jnp.dot(a_ref[...], x_blk,
                                preferred_element_type=jnp.float32)

        @pl.when(k == pl.num_programs(1) - 1)
        def _():
            # MLP with bf16 operands, f32 accumulation (cheap on v5e MXU too).
            h = acc_ref[...].astype(jnp.bfloat16)                # [tm, f_in]
            t = jnp.dot(h, w1_ref[...], preferred_element_type=jnp.float32)
            t = jnp.maximum(t + b1_ref[...], 0.0).astype(jnp.bfloat16)
            z = jnp.dot(t, w2_ref[...], preferred_element_type=jnp.float32)
            z = jnp.maximum(z + b2_ref[...], 0.0)                # outer F.relu
            z = z * bn_scale_ref[...] + bn_shift_ref[...]        # eval BatchNorm1d
            out_ref[...] = z.astype(out_ref.dtype)
            if emit_logp:
                col = lax.broadcasted_iota(jnp.int32, z.shape, 1)
                valid = col < num_valid_classes
                zm = jnp.where(valid, z, -jnp.inf)
                m = jnp.max(zm, axis=-1, keepdims=True)
                s = jnp.sum(jnp.exp(zm - m), axis=-1, keepdims=True)
                logp = z - (jnp.log(s) + m)
                logp_ref[...] = jnp.where(valid, logp, 0.0)

    return kernel


def _gin_layer(a_hat, x_p, w1, b1, w2, b2, bn_scale, bn_shift,
               *, tm, tk, x_resident, out_dtype, num_valid_classes=None):
    n_p = a_hat.shape[0]
    f_in = x_p.shape[1]
    d_hid = w1.shape[1]
    d_out = w2.shape[1]
    grid = (n_p // tm, n_p // tk)

    pinned = lambda shape: pl.BlockSpec(shape, lambda i, k: (0, 0))
    if x_resident:
        x_spec = pinned((n_p, f_in))                       # whole x pinned in VMEM
    else:
        x_spec = pl.BlockSpec((tk, f_in), lambda i, k: (k, 0))

    in_specs = [
        pl.BlockSpec((tm, tk), lambda i, k: (i, k)),       # Â tile (bf16)
        x_spec,                                            # x / h1 (bf16)
        pinned((f_in, d_hid)),                             # W1 (bf16, resident)
        pinned((1, d_hid)),                                # b1 (f32)
        pinned((d_hid, d_out)),                            # W2 (bf16)
        pinned((1, d_out)),                                # b2 (f32)
        pinned((1, d_out)),                                # BN scale
        pinned((1, d_out)),                                # BN shift
    ]
    row_out = lambda: pl.BlockSpec((tm, d_out), lambda i, k: (i, 0))
    if num_valid_classes is None:
        out_specs = row_out()
        out_shape = jax.ShapeDtypeStruct((n_p, d_out), out_dtype)
        out_bytes = (jnp.dtype(out_dtype).itemsize,)
    else:
        out_specs = [row_out(), row_out()]
        out_shape = [jax.ShapeDtypeStruct((n_p, d_out), out_dtype),     # logits
                     jax.ShapeDtypeStruct((n_p, d_out), jnp.float32)]   # log_softmax
        out_bytes = (jnp.dtype(out_dtype).itemsize, 4)

    # VMEM footprint estimate -> scoped limit with headroom (portable to v7x).
    footprint = 2 * tm * tk * 2                                    # Â, double-buffered bf16
    footprint += (n_p * f_in * 2) if x_resident else (2 * tk * f_in * 2)
    footprint += (f_in * d_hid + d_hid * d_out) * 2                # bf16 weights
    footprint += (d_hid + 3 * d_out) * 4                           # biases + BN affine
    footprint += tm * f_in * 4                                     # f32 accumulator
    footprint += sum(2 * tm * d_out * b for b in out_bytes)        # outputs
    vmem_limit = int(min(max(2 * footprint + (4 << 20), 16 << 20), 44 << 20))

    return pl.pallas_call(
        _make_gin_layer_kernel(tk=tk, x_resident=x_resident,
                               num_valid_classes=num_valid_classes),
        grid=grid,
        in_specs=in_specs,
        out_specs=out_specs,
        out_shape=out_shape,
        scratch_shapes=[pltpu.VMEM((tm, f_in), jnp.float32)],
        compiler_params=pltpu.CompilerParams(
            dimension_semantics=("parallel", "arbitrary"),
            vmem_limit_bytes=vmem_limit),
    )(a_hat, x_p, w1, b1, w2, b2, bn_scale, bn_shift)


def _prepare(x, edge_index, params):
    """Pad to TPU-friendly shapes and build the dense GIN operator (one pass)."""
    n, f = x.shape
    d = params["w1a"].shape[1]
    c = params["w2b"].shape[1]
    n_p = _round_up(n, _LANE)
    fp = _round_up(f, _LANE)
    dp = _round_up(d, _LANE)
    cp = _round_up(c, _LANE)

    # Dense GIN operator Â = A_sum + (1+eps)*I built with a single scatter-add
    # (diagonal folded into the scatter), then cast to bf16.
    src, dst = edge_index[0], edge_index[1]
    diag = jnp.arange(n, dtype=src.dtype)
    rows = jnp.concatenate([dst, diag])
    cols = jnp.concatenate([src, diag])
    vals = jnp.concatenate([jnp.ones(src.shape, jnp.float32),
                            jnp.full((n,), 1.0 + _GIN_EPS, jnp.float32)])
    a_hat = (jnp.zeros((n_p, n_p), jnp.float32)
             .at[rows, cols].add(vals)
             .astype(jnp.bfloat16))

    # Activations and MLP weights in bf16 (f32 accumulation in-kernel).
    x_p = _pad2(x, n_p, fp, jnp.bfloat16)

    def bn_affine(gamma, beta, mean, var, width):
        scale = gamma / jnp.sqrt(var + _BN_EPS)
        shift = beta - mean * scale
        return (_pad2(scale[None, :], 1, width, jnp.float32),
                _pad2(shift[None, :], 1, width, jnp.float32))

    s1, t1 = bn_affine(params["bn1_gamma"], params["bn1_beta"],
                       params["bn1_mean"], params["bn1_var"], dp)
    s2, t2 = bn_affine(params["bn2_gamma"], params["bn2_beta"],
                       params["bn2_mean"], params["bn2_var"], cp)

    layer1 = (_pad2(params["w1a"], fp, dp, jnp.bfloat16),
              _pad2(params["b1a"][None, :], 1, dp, jnp.float32),
              _pad2(params["w1b"], dp, dp, jnp.bfloat16),
              _pad2(params["b1b"][None, :], 1, dp, jnp.float32),
              s1, t1)
    layer2 = (_pad2(params["w2a"], dp, dp, jnp.bfloat16),
              _pad2(params["b2a"][None, :], 1, dp, jnp.float32),
              _pad2(params["w2b"], dp, cp, jnp.bfloat16),
              _pad2(params["b2b"][None, :], 1, cp, jnp.float32),
              s2, t2)
    dims = {"n": n, "c": c, "n_p": n_p, "fp": fp, "dp": dp, "cp": cp}
    return a_hat, x_p, layer1, layer2, dims


def _choose_tm(n_p):
    # Largest row tile that still leaves >= 2 row blocks (keeps both v7x
    # TensorCores busy); tiny graphs fall back to a single 128-row block.
    for t in (512, 256, 128):
        if n_p % t == 0 and n_p // t >= 2:
            return t
    return 128


def _choose_tk(n_p):
    for t in (1024, 512, 256, 128):
        if n_p % t == 0:
            return t
    return 128


def gin_forward(x, edge_index, params):
    """x: [N, F] float32, edge_index: [2, E] int32 (row 0 = src, row 1 = dst)."""
    a_hat, x_p, layer1, layer2, dims = _prepare(x, edge_index, params)
    n_p, fp, dp = dims["n_p"], dims["fp"], dims["dp"]
    tm = _choose_tm(n_p)
    tk = _choose_tk(n_p)
    # Pin the full activation operand in VMEM when it fits comfortably.
    x_resident = max(n_p * fp, n_p * dp) * 2 <= _X_RESIDENT_BYTES

    h1 = _gin_layer(a_hat, x_p, *layer1, tm=tm, tk=tk, x_resident=x_resident,
                    out_dtype=jnp.bfloat16)
    # dropout: identity in eval mode
    logits_p, logp_p = _gin_layer(a_hat, h1, *layer2, tm=tm, tk=tk,
                                  x_resident=x_resident, out_dtype=jnp.float32,
                                  num_valid_classes=dims["c"])
    n, c = dims["n"], dims["c"]
    return logp_p[:n, :c], logits_p[:n, :c]


def _reference_forward(x, edge_index, params):
    """Pure-JAX reference with matching numerics (bf16 Â / activations / weights)."""
    a_hat, x_p, layer1, layer2, dims = _prepare(x, edge_index, params)

    def layer(h_bf16, w1, b1, w2, b2, sc, sh):
        agg = jnp.dot(a_hat, h_bf16, preferred_element_type=jnp.float32)
        t = jnp.maximum(
            jnp.dot(agg.astype(jnp.bfloat16), w1,
                    preferred_element_type=jnp.float32) + b1, 0.0)
        z = jnp.maximum(
            jnp.dot(t.astype(jnp.bfloat16), w2,
                    preferred_element_type=jnp.float32) + b2, 0.0)
        return z * sc + sh

    h1 = layer(x_p, *layer1).astype(jnp.bfloat16)
    z2 = layer(h1, *layer2)
    n, c = dims["n"], dims["c"]
    logits = z2[:n, :c]
    return jax.nn.log_softmax(logits, axis=1), logits


def init_params(key, num_features, num_classes, dim=16):
    ks = jax.random.split(key, 8)

    def lin(k, fan_in, shape):
        bound = 1.0 / jnp.sqrt(float(fan_in))
        return jax.random.uniform(k, shape, jnp.float32, -bound, bound)

    return {
        # GINConv1 MLP: Linear(F, dim), ReLU, Linear(dim, dim)
        "w1a": lin(ks[0], num_features, (num_features, dim)),
        "b1a": lin(ks[1], num_features, (dim,)),
        "w1b": lin(ks[2], dim, (dim, dim)),
        "b1b": lin(ks[3], dim, (dim,)),
        # GINConv2 MLP: Linear(dim, dim), ReLU, Linear(dim, C)
        "w2a": lin(ks[4], dim, (dim, dim)),
        "b2a": lin(ks[5], dim, (dim,)),
        "w2b": lin(ks[6], dim, (dim, num_classes)),
        "b2b": lin(ks[7], dim, (num_classes,)),
        # BatchNorm1d (eval-mode running stats + affine), PyTorch defaults
        "bn1_gamma": jnp.ones((dim,), jnp.float32),
        "bn1_beta": jnp.zeros((dim,), jnp.float32),
        "bn1_mean": jnp.zeros((dim,), jnp.float32),
        "bn1_var": jnp.ones((dim,), jnp.float32),
        "bn2_gamma": jnp.ones((num_classes,), jnp.float32),
        "bn2_beta": jnp.zeros((num_classes,), jnp.float32),
        "bn2_mean": jnp.zeros((num_classes,), jnp.float32),
        "bn2_var": jnp.ones((num_classes,), jnp.float32),
    }


if __name__ == "__main__":
    key = jax.random.PRNGKey(0)
    k_x, k_e, k_p = jax.random.split(key, 3)

    num_nodes = 16
    num_features = 8
    num_classes = 4
    num_edges = 40
    dim = 16

    x = jax.random.normal(k_x, (num_nodes, num_features), jnp.float32)
    edge_index = jax.random.randint(k_e, (2, num_edges), 0, num_nodes,
                                    dtype=jnp.int32)
    params = init_params(k_p, num_features, num_classes, dim=dim)

    logp, logits = jax.jit(gin_forward)(x, edge_index, params)
    jax.block_until_ready((logp, logits))

    assert logp.shape == (num_nodes, num_classes)
    assert logits.shape == (num_nodes, num_classes)
    # log_softmax rows should sum (in prob space) to ~1
    assert jnp.allclose(jnp.sum(jnp.exp(logp), axis=1), 1.0, atol=1e-4)

    # Matched-numerics pure-JAX reference check.
    logp_ref, logits_ref = jax.jit(_reference_forward)(x, edge_index, params)
    assert jnp.allclose(logits, logits_ref, atol=1e-2, rtol=1e-2)
    assert jnp.allclose(logp, logp_ref, atol=1e-2, rtol=1e-2)

    print("KERNEL_OK")
</pallas_src>

<mosaic_0001>
module attributes {stable_mosaic.version = 11 : i64} {
  func.func private @main(%arg0: i32) attributes {dimension_semantics = [#tpu.dimension_semantics<core_parallel>], iteration_bounds = array<i64: 2>, tpu.core_type = #tpu.core_type<sc_scalar_subcore>, window_params = []} {
    return
  }
}

module attributes {stable_mosaic.version = 11 : i64} {
  func.func private @main(%arg0: i32) attributes {dimension_semantics = [#tpu.dimension_semantics<core_parallel>], iteration_bounds = array<i64: 2>, tpu.core_type = #tpu.core_type<sc_scalar_subcore>, window_params = []} {
    return
  }
}

module attributes {stable_mosaic.version = 11 : i64} {
  func.func @kernel(%arg0: i32, %arg1: i32, %arg2: memref<128x128xbf16, #tpu.memory_space<vmem>>, %arg3: memref<128x128xbf16, #tpu.memory_space<vmem>>, %arg4: memref<128x128xbf16, #tpu.memory_space<vmem>>, %arg5: memref<1x128xf32, #tpu.memory_space<vmem>>, %arg6: memref<128x128xbf16, #tpu.memory_space<vmem>>, %arg7: memref<1x128xf32, #tpu.memory_space<vmem>>, %arg8: memref<1x128xf32, #tpu.memory_space<vmem>>, %arg9: memref<1x128xf32, #tpu.memory_space<vmem>>, %arg10: memref<128x128xbf16, #tpu.memory_space<vmem>>, %arg11: memref<128x128xf32, #tpu.memory_space<vmem>>) attributes {dimension_semantics = [#tpu.dimension_semantics<parallel>, #tpu.dimension_semantics<arbitrary>], iteration_bounds = array<i64: 1, 1>, scalar_prefetch = 0 : i64, scratch_operands = 1 : i64, tpu.core_type = #tpu.core_type<tc>, window_params = [{transform_indices = @transform_0, window_bounds = array<i64: 128, 128>}, {pipeline_mode = #tpu.pipeline_mode<synchronous>, transform_indices = @transform_1, window_bounds = array<i64: 128, 128>}, {pipeline_mode = #tpu.pipeline_mode<synchronous>, transform_indices = @transform_2, window_bounds = array<i64: 128, 128>}, {pipeline_mode = #tpu.pipeline_mode<synchronous>, transform_indices = @transform_3, window_bounds = array<i64: 1, 128>}, {pipeline_mode = #tpu.pipeline_mode<synchronous>, transform_indices = @transform_4, window_bounds = array<i64: 128, 128>}, {pipeline_mode = #tpu.pipeline_mode<synchronous>, transform_indices = @transform_5, window_bounds = array<i64: 1, 128>}, {pipeline_mode = #tpu.pipeline_mode<synchronous>, transform_indices = @transform_6, window_bounds = array<i64: 1, 128>}, {pipeline_mode = #tpu.pipeline_mode<synchronous>, transform_indices = @transform_7, window_bounds = array<i64: 1, 128>}, {transform_indices = @transform_8, window_bounds = array<i64: 128, 128>}]} {
    %c0_i32 = arith.constant 0 : i32
    %0 = arith.cmpi eq, %arg1, %c0_i32 : i32
    %1 = arith.extui %0 : i1 to i32
    %c0_i32_0 = arith.constant 0 : i32
    %2 = arith.cmpi ne, %1, %c0_i32_0 : i32
    scf.if %2 {
      %cst_9 = arith.constant 0.000000e+00 : f32
      %15 = vector.broadcast %cst_9 : f32 to vector<128x128xf32>
      %c0_10 = arith.constant 0 : index
      %c0_11 = arith.constant 0 : index
      %16 = vector.load %arg11[%c0_10, %c0_11] : memref<128x128xf32, #tpu.memory_space<vmem>>, vector<128x128xf32>
      tpu.vector_store %arg11[%c0_10, %c0_11], %15 {strides = array<i32>} : memref<128x128xf32, #tpu.memory_space<vmem>>, vector<128x128xf32>,
    } else {
    }
    %c128_i32 = arith.constant 128 : i32
    %3 = arith.muli %arg1, %c128_i32 : i32
    %4 = tpu.assume_multiple %3, 128 : i32
    %5 = arith.index_cast %4 : i32 to index
    %c0 = arith.constant 0 : index
    %6 = vector.load %arg3[%5, %c0] : memref<128x128xbf16, #tpu.memory_space<vmem>>, vector<128x128xbf16>
    %c0_1 = arith.constant 0 : index
    %c0_2 = arith.constant 0 : index
    %7 = vector.load %arg11[%c0_1, %c0_2] : memref<128x128xf32, #tpu.memory_space<vmem>>, vector<128x128xf32>
    %c0_3 = arith.constant 0 : index
    %c0_4 = arith.constant 0 : index
    %8 = vector.load %arg2[%c0_3, %c0_4] : memref<128x128xbf16, #tpu.memory_space<vmem>>, vector<128x128xbf16>
    %cst = arith.constant dense<0.000000e+00> : vector<128x128xf32>
    %9 = tpu.matmul %8, %6, %cst {dimension_numbers = #tpu.dot_dimension_numbers<[1], [0], [0], [1], [0, 0, 1, 1], [], []>} : vector<128x128xbf16>, vector<128x128xbf16>, vector<128x128xf32> -> vector<128x128xf32>
    %10 = arith.addf %7, %9 : vector<128x128xf32>
    %c0_5 = arith.constant 0 : index
    %c0_6 = arith.constant 0 : index
    %11 = vector.load %arg11[%c0_5, %c0_6] : memref<128x128xf32, #tpu.memory_space<vmem>>, vector<128x128xf32>
    tpu.vector_store %arg11[%c0_5, %c0_6], %10 {strides = array<i32>} : memref<128x128xf32, #tpu.memory_space<vmem>>, vector<128x128xf32>,
    %c0_i32_7 = arith.constant 0 : i32
    %12 = arith.cmpi eq, %arg1, %c0_i32_7 : i32
    %13 = arith.extui %12 : i1 to i32
    %c0_i32_8 = arith.constant 0 : i32
    %14 = arith.cmpi ne, %13, %c0_i32_8 : i32
    scf.if %14 {
      %c0_9 = arith.constant 0 : index
      %c0_10 = arith.constant 0 : index
      %15 = vector.load %arg11[%c0_9, %c0_10] : memref<128x128xf32, #tpu.memory_space<vmem>>, vector<128x128xf32>
      %16 = arith.truncf %15 : vector<128x128xf32> to vector<128x128xbf16>
      %c0_11 = arith.constant 0 : index
      %c0_12 = arith.constant 0 : index
      %17 = vector.load %arg4[%c0_11, %c0_12] : memref<128x128xbf16, #tpu.memory_space<vmem>>, vector<128x128xbf16>
      %cst_13 = arith.constant dense<0.000000e+00> : vector<128x128xf32>
      %18 = tpu.matmul %16, %17, %cst_13 {dimension_numbers = #tpu.dot_dimension_numbers<[1], [0], [0], [1], [0, 0, 1, 1], [], []>} : vector<128x128xbf16>, vector<128x128xbf16>, vector<128x128xf32> -> vector<128x128xf32>
      %c0_14 = arith.constant 0 : index
      %c0_15 = arith.constant 0 : index
      %19 = vector.load %arg5[%c0_14, %c0_15] : memref<1x128xf32, #tpu.memory_space<vmem>>, vector<1x128xf32>
      %20 = vector.broadcast %19 : vector<1x128xf32> to vector<128x128xf32>
      %21 = arith.addf %18, %20 : vector<128x128xf32>
      %cst_16 = arith.constant 0.000000e+00 : f32
      %22 = vector.broadcast %cst_16 : f32 to vector<128x128xf32>
      %23 = arith.maximumf %21, %22 : vector<128x128xf32>
      %24 = arith.truncf %23 : vector<128x128xf32> to vector<128x128xbf16>
      %c0_17 = arith.constant 0 : index
      %c0_18 = arith.constant 0 : index
      %25 = vector.load %arg6[%c0_17, %c0_18] : memref<128x128xbf16, #tpu.memory_space<vmem>>, vector<128x128xbf16>
      %cst_19 = arith.constant dense<0.000000e+00> : vector<128x128xf32>
      %26 = tpu.matmul %24, %25, %cst_19 {dimension_numbers = #tpu.dot_dimension_numbers<[1], [0], [0], [1], [0, 0, 1, 1], [], []>} : vector<128x128xbf16>, vector<128x128xbf16>, vector<128x128xf32> -> vector<128x128xf32>
      %c0_20 = arith.constant 0 : index
      %c0_21 = arith.constant 0 : index
      %27 = vector.load %arg7[%c0_20, %c0_21] : memref<1x128xf32, #tpu.memory_space<vmem>>, vector<1x128xf32>
      %28 = vector.broadcast %27 : vector<1x128xf32> to vector<128x128xf32>
      %29 = arith.addf %26, %28 : vector<128x128xf32>
      %cst_22 = arith.constant 0.000000e+00 : f32
      %30 = vector.broadcast %cst_22 : f32 to vector<128x128xf32>
      %31 = arith.maximumf %29, %30 : vector<128x128xf32>
      %c0_23 = arith.constant 0 : index
      %c0_24 = arith.constant 0 : index
      %32 = vector.load %arg8[%c0_23, %c0_24] : memref<1x128xf32, #tpu.memory_space<vmem>>, vector<1x128xf32>
      %33 = vector.broadcast %32 : vector<1x128xf32> to vector<128x128xf32>
      %34 = arith.mulf %31, %33 : vector<128x128xf32>
      %c0_25 = arith.constant 0 : index
      %c0_26 = arith.constant 0 : index
      %35 = vector.load %arg9[%c0_25, %c0_26] : memref<1x128xf32, #tpu.memory_space<vmem>>, vector<1x128xf32>
      %36 = vector.broadcast %35 : vector<1x128xf32> to vector<128x128xf32>
      %37 = arith.addf %34, %36 : vector<128x128xf32>
      %38 = arith.truncf %37 : vector<128x128xf32> to vector<128x128xbf16>
      %c0_27 = arith.constant 0 : index
      %c0_28 = arith.constant 0 : index
      %39 = vector.load %arg10[%c0_27, %c0_28] : memref<128x128xbf16, #tpu.memory_space<vmem>>, vector<128x128xbf16>
      tpu.vector_store %arg10[%c0_27, %c0_28], %38 {strides = array<i32>} : memref<128x128xbf16, #tpu.memory_space<vmem>>, vector<128x128xbf16>,
    } else {
    }
    return
  }
  func.func @transform_0(%arg0: i32, %arg1: i32) -> (i32, i32) {
    %c0_i32 = arith.constant 0 : i32
    return %arg0, %arg1 : i32, i32
  }
  func.func @transform_1(%arg0: i32, %arg1: i32) -> (i32, i32) {
    %c0_i32 = arith.constant 0 : i32
    %c0_i32_0 = arith.constant 0 : i32
    %c0_i32_1 = arith.constant 0 : i32
    return %c0_i32, %c0_i32_0 : i32, i32
  }
  func.func @transform_2(%arg0: i32, %arg1: i32) -> (i32, i32) {
    %c0_i32 = arith.constant 0 : i32
    %c0_i32_0 = arith.constant 0 : i32
    %c0_i32_1 = arith.constant 0 : i32
    return %c0_i32, %c0_i32_0 : i32, i32
  }
  func.func @transform_3(%arg0: i32, %arg1: i32) -> (i32, i32) {
    %c0_i32 = arith.constant 0 : i32
    %c0_i32_0 = arith.constant 0 : i32
    %c0_i32_1 = arith.constant 0 : i32
    return %c0_i32, %c0_i32_0 : i32, i32
  }
  func.func @transform_4(%arg0: i32, %arg1: i32) -> (i32, i32) {
    %c0_i32 = arith.constant 0 : i32
    %c0_i32_0 = arith.constant 0 : i32
    %c0_i32_1 = arith.constant 0 : i32
    return %c0_i32, %c0_i32_0 : i32, i32
  }
  func.func @transform_5(%arg0: i32, %arg1: i32) -> (i32, i32) {
    %c0_i32 = arith.constant 0 : i32
    %c0_i32_0 = arith.constant 0 : i32
    %c0_i32_1 = arith.constant 0 : i32
    return %c0_i32, %c0_i32_0 : i32, i32
  }
  func.func @transform_6(%arg0: i32, %arg1: i32) -> (i32, i32) {
    %c0_i32 = arith.constant 0 : i32
    %c0_i32_0 = arith.constant 0 : i32
    %c0_i32_1 = arith.constant 0 : i32
    return %c0_i32, %c0_i32_0 : i32, i32
  }
  func.func @transform_7(%arg0: i32, %arg1: i32) -> (i32, i32) {
    %c0_i32 = arith.constant 0 : i32
    %c0_i32_0 = arith.constant 0 : i32
    %c0_i32_1 = arith.constant 0 : i32
    return %c0_i32, %c0_i32_0 : i32, i32
  }
  func.func @transform_8(%arg0: i32, %arg1: i32) -> (i32, i32) {
    %c0_i32 = arith.constant 0 : i32
    %c0_i32_0 = arith.constant 0 : i32
    return %arg0, %c0_i32 : i32, i32
  }
}

module attributes {stable_mosaic.version = 11 : i64} {
  func.func @kernel(%arg0: i32, %arg1: i32, %arg2: memref<128x128xbf16, #tpu.memory_space<vmem>>, %arg3: memref<128x128xbf16, #tpu.memory_space<vmem>>, %arg4: memref<128x128xbf16, #tpu.memory_space<vmem>>, %arg5: memref<1x128xf32, #tpu.memory_space<vmem>>, %arg6: memref<128x128xbf16, #tpu.memory_space<vmem>>, %arg7: memref<1x128xf32, #tpu.memory_space<vmem>>, %arg8: memref<1x128xf32, #tpu.memory_space<vmem>>, %arg9: memref<1x128xf32, #tpu.memory_space<vmem>>, %arg10: memref<128x128xf32, #tpu.memory_space<vmem>>, %arg11: memref<128x128xf32, #tpu.memory_space<vmem>>, %arg12: memref<128x128xf32, #tpu.memory_space<vmem>>) attributes {dimension_semantics = [#tpu.dimension_semantics<parallel>, #tpu.dimension_semantics<arbitrary>], iteration_bounds = array<i64: 1, 1>, scalar_prefetch = 0 : i64, scratch_operands = 1 : i64, tpu.core_type = #tpu.core_type<tc>, window_params = [{transform_indices = @transform_0, window_bounds = array<i64: 128, 128>}, {pipeline_mode = #tpu.pipeline_mode<synchronous>, transform_indices = @transform_1, window_bounds = array<i64: 128, 128>}, {pipeline_mode = #tpu.pipeline_mode<synchronous>, transform_indices = @transform_2, window_bounds = array<i64: 128, 128>}, {pipeline_mode = #tpu.pipeline_mode<synchronous>, transform_indices = @transform_3, window_bounds = array<i64: 1, 128>}, {pipeline_mode = #tpu.pipeline_mode<synchronous>, transform_indices = @transform_4, window_bounds = array<i64: 128, 128>}, {pipeline_mode = #tpu.pipeline_mode<synchronous>, transform_indices = @transform_5, window_bounds = array<i64: 1, 128>}, {pipeline_mode = #tpu.pipeline_mode<synchronous>, transform_indices = @transform_6, window_bounds = array<i64: 1, 128>}, {pipeline_mode = #tpu.pipeline_mode<synchronous>, transform_indices = @transform_7, window_bounds = array<i64: 1, 128>}, {transform_indices = @transform_8, window_bounds = array<i64: 128, 128>}, {transform_indices = @transform_9, window_bounds = array<i64: 128, 128>}]} {
    %c0_i32 = arith.constant 0 : i32
    %0 = arith.cmpi eq, %arg1, %c0_i32 : i32
    %1 = arith.extui %0 : i1 to i32
    %c0_i32_0 = arith.constant 0 : i32
    %2 = arith.cmpi ne, %1, %c0_i32_0 : i32
    scf.if %2 {
      %cst_9 = arith.constant 0.000000e+00 : f32
      %15 = vector.broadcast %cst_9 : f32 to vector<128x128xf32>
      %c0_10 = arith.constant 0 : index
      %c0_11 = arith.constant 0 : index
      %16 = vector.load %arg12[%c0_10, %c0_11] : memref<128x128xf32, #tpu.memory_space<vmem>>, vector<128x128xf32>
      tpu.vector_store %arg12[%c0_10, %c0_11], %15 {strides = array<i32>} : memref<128x128xf32, #tpu.memory_space<vmem>>, vector<128x128xf32>,
    } else {
    }
    %c128_i32 = arith.constant 128 : i32
    %3 = arith.muli %arg1, %c128_i32 : i32
    %4 = tpu.assume_multiple %3, 128 : i32
    %5 = arith.index_cast %4 : i32 to index
    %c0 = arith.constant 0 : index
    %6 = vector.load %arg3[%5, %c0] : memref<128x128xbf16, #tpu.memory_space<vmem>>, vector<128x128xbf16>
    %c0_1 = arith.constant 0 : index
    %c0_2 = arith.constant 0 : index
    %7 = vector.load %arg12[%c0_1, %c0_2] : memref<128x128xf32, #tpu.memory_space<vmem>>, vector<128x128xf32>
    %c0_3 = arith.constant 0 : index
    %c0_4 = arith.constant 0 : index
    %8 = vector.load %arg2[%c0_3, %c0_4] : memref<128x128xbf16, #tpu.memory_space<vmem>>, vector<128x128xbf16>
    %cst = arith.constant dense<0.000000e+00> : vector<128x128xf32>
    %9 = tpu.matmul %8, %6, %cst {dimension_numbers = #tpu.dot_dimension_numbers<[1], [0], [0], [1], [0, 0, 1, 1], [], []>} : vector<128x128xbf16>, vector<128x128xbf16>, vector<128x128xf32> -> vector<128x128xf32>
    %10 = arith.addf %7, %9 : vector<128x128xf32>
    %c0_5 = arith.constant 0 : index
    %c0_6 = arith.constant 0 : index
    %11 = vector.load %arg12[%c0_5, %c0_6] : memref<128x128xf32, #tpu.memory_space<vmem>>, vector<128x128xf32>
    tpu.vector_store %arg12[%c0_5, %c0_6], %10 {strides = array<i32>} : memref<128x128xf32, #tpu.memory_space<vmem>>, vector<128x128xf32>,
    %c0_i32_7 = arith.constant 0 : i32
    %12 = arith.cmpi eq, %arg1, %c0_i32_7 : i32
    %13 = arith.extui %12 : i1 to i32
    %c0_i32_8 = arith.constant 0 : i32
    %14 = arith.cmpi ne, %13, %c0_i32_8 : i32
    scf.if %14 {
      %c0_9 = arith.constant 0 : index
      %c0_10 = arith.constant 0 : index
      %15 = vector.load %arg12[%c0_9, %c0_10] : memref<128x128xf32, #tpu.memory_space<vmem>>, vector<128x128xf32>
      %16 = arith.truncf %15 : vector<128x128xf32> to vector<128x128xbf16>
      %c0_11 = arith.constant 0 : index
      %c0_12 = arith.constant 0 : index
      %17 = vector.load %arg4[%c0_11, %c0_12] : memref<128x128xbf16, #tpu.memory_space<vmem>>, vector<128x128xbf16>
      %cst_13 = arith.constant dense<0.000000e+00> : vector<128x128xf32>
      %18 = tpu.matmul %16, %17, %cst_13 {dimension_numbers = #tpu.dot_dimension_numbers<[1], [0], [0], [1], [0, 0, 1, 1], [], []>} : vector<128x128xbf16>, vector<128x128xbf16>, vector<128x128xf32> -> vector<128x128xf32>
      %c0_14 = arith.constant 0 : index
      %c0_15 = arith.constant 0 : index
      %19 = vector.load %arg5[%c0_14, %c0_15] : memref<1x128xf32, #tpu.memory_space<vmem>>, vector<1x128xf32>
      %20 = vector.broadcast %19 : vector<1x128xf32> to vector<128x128xf32>
      %21 = arith.addf %18, %20 : vector<128x128xf32>
      %cst_16 = arith.constant 0.000000e+00 : f32
      %22 = vector.broadcast %cst_16 : f32 to vector<128x128xf32>
      %23 = arith.maximumf %21, %22 : vector<128x128xf32>
      %24 = arith.truncf %23 : vector<128x128xf32> to vector<128x128xbf16>
      %c0_17 = arith.constant 0 : index
      %c0_18 = arith.constant 0 : index
      %25 = vector.load %arg6[%c0_17, %c0_18] : memref<128x128xbf16, #tpu.memory_space<vmem>>, vector<128x128xbf16>
      %cst_19 = arith.constant dense<0.000000e+00> : vector<128x128xf32>
      %26 = tpu.matmul %24, %25, %cst_19 {dimension_numbers = #tpu.dot_dimension_numbers<[1], [0], [0], [1], [0, 0, 1, 1], [], []>} : vector<128x128xbf16>, vector<128x128xbf16>, vector<128x128xf32> -> vector<128x128xf32>
      %c0_20 = arith.constant 0 : index
      %c0_21 = arith.constant 0 : index
      %27 = vector.load %arg7[%c0_20, %c0_21] : memref<1x128xf32, #tpu.memory_space<vmem>>, vector<1x128xf32>
      %28 = vector.broadcast %27 : vector<1x128xf32> to vector<128x128xf32>
      %29 = arith.addf %26, %28 : vector<128x128xf32>
      %cst_22 = arith.constant 0.000000e+00 : f32
      %30 = vector.broadcast %cst_22 : f32 to vector<128x128xf32>
      %31 = arith.maximumf %29, %30 : vector<128x128xf32>
      %c0_23 = arith.constant 0 : index
      %c0_24 = arith.constant 0 : index
      %32 = vector.load %arg8[%c0_23, %c0_24] : memref<1x128xf32, #tpu.memory_space<vmem>>, vector<1x128xf32>
      %33 = vector.broadcast %32 : vector<1x128xf32> to vector<128x128xf32>
      %34 = arith.mulf %31, %33 : vector<128x128xf32>
      %c0_25 = arith.constant 0 : index
      %c0_26 = arith.constant 0 : index
      %35 = vector.load %arg9[%c0_25, %c0_26] : memref<1x128xf32, #tpu.memory_space<vmem>>, vector<1x128xf32>
      %36 = vector.broadcast %35 : vector<1x128xf32> to vector<128x128xf32>
      %37 = arith.addf %34, %36 : vector<128x128xf32>
      %c0_27 = arith.constant 0 : index
      %c0_28 = arith.constant 0 : index
      %38 = vector.load %arg10[%c0_27, %c0_28] : memref<128x128xf32, #tpu.memory_space<vmem>>, vector<128x128xf32>
      tpu.vector_store %arg10[%c0_27, %c0_28], %37 {strides = array<i32>} : memref<128x128xf32, #tpu.memory_space<vmem>>, vector<128x128xf32>,
      %39 = tpu.iota {dimensions = array<i32: 1>} : vector<128x128xi32>
      %c4_i32 = arith.constant 4 : i32
      %40 = vector.broadcast %c4_i32 : i32 to vector<128x128xi32>
      %41 = arith.cmpi slt, %39, %40 : vector<128x128xi32>
      %cst_29 = arith.constant 0xFF800000 : f32
      %42 = vector.broadcast %cst_29 : f32 to vector<128x128xf32>
      %43 = arith.select %41, %37, %42 : vector<128x128xi1>, vector<128x128xf32>
      %cst_30 = arith.constant dense<0xFF800000> : vector<128xf32>
      %44 = vector.multi_reduction <maximumf>, %43, %cst_30 [1] : vector<128x128xf32> to vector<128xf32>
      %45 = vector.shape_cast %44 : vector<128xf32> to vector<128x1xf32>
      %46 = vector.broadcast %45 : vector<128x1xf32> to vector<128x128xf32>
      %47 = arith.subf %43, %46 : vector<128x128xf32>
      %48 = math.exp %47 : vector<128x128xf32>
      %cst_31 = arith.constant dense<0.000000e+00> : vector<128xf32>
      %49 = vector.multi_reduction <add>, %48, %cst_31 [1] : vector<128x128xf32> to vector<128xf32>
      %50 = vector.shape_cast %49 : vector<128xf32> to vector<128x1xf32>
      %51 = math.log %50 : vector<128x1xf32>
      %52 = arith.addf %51, %45 : vector<128x1xf32>
      %53 = vector.broadcast %52 : vector<128x1xf32> to vector<128x128xf32>
      %54 = arith.subf %37, %53 : vector<128x128xf32>
      %cst_32 = arith.constant 0.000000e+00 : f32
      %55 = vector.broadcast %cst_32 : f32 to vector<128x128xf32>
      %56 = arith.select %41, %54, %55 : vector<128x128xi1>, vector<128x128xf32>
      %c0_33 = arith.constant 0 : index
      %c0_34 = arith.constant 0 : index
      %57 = vector.load %arg11[%c0_33, %c0_34] : memref<128x128xf32, #tpu.memory_space<vmem>>, vector<128x128xf32>
      tpu.vector_store %arg11[%c0_33, %c0_34], %56 {strides = array<i32>} : memref<128x128xf32, #tpu.memory_space<vmem>>, vector<128x128xf32>,
    } else {
    }
    return
  }
  func.func @transform_0(%arg0: i32, %arg1: i32) -> (i32, i32) {
    %c0_i32 = arith.constant 0 : i32
    return %arg0, %arg1 : i32, i32
  }
  func.func @transform_1(%arg0: i32, %arg1: i32) -> (i32, i32) {
    %c0_i32 = arith.constant 0 : i32
    %c0_i32_0 = arith.constant 0 : i32
    %c0_i32_1 = arith.constant 0 : i32
    return %c0_i32, %c0_i32_0 : i32, i32
  }
  func.func @transform_2(%arg0: i32, %arg1: i32) -> (i32, i32) {
    %c0_i32 = arith.constant 0 : i32
    %c0_i32_0 = arith.constant 0 : i32
    %c0_i32_1 = arith.constant 0 : i32
    return %c0_i32, %c0_i32_0 : i32, i32
  }
  func.func @transform_3(%arg0: i32, %arg1: i32) -> (i32, i32) {
    %c0_i32 = arith.constant 0 : i32
    %c0_i32_0 = arith.constant 0 : i32
    %c0_i32_1 = arith.constant 0 : i32
    return %c0_i32, %c0_i32_0 : i32, i32
  }
  func.func @transform_4(%arg0: i32, %arg1: i32) -> (i32, i32) {
    %c0_i32 = arith.constant 0 : i32
    %c0_i32_0 = arith.constant 0 : i32
    %c0_i32_1 = arith.constant 0 : i32
    return %c0_i32, %c0_i32_0 : i32, i32
  }
  func.func @transform_5(%arg0: i32, %arg1: i32) -> (i32, i32) {
    %c0_i32 = arith.constant 0 : i32
    %c0_i32_0 = arith.constant 0 : i32
    %c0_i32_1 = arith.constant 0 : i32
    return %c0_i32, %c0_i32_0 : i32, i32
  }
  func.func @transform_6(%arg0: i32, %arg1: i32) -> (i32, i32) {
    %c0_i32 = arith.constant 0 : i32
    %c0_i32_0 = arith.constant 0 : i32
    %c0_i32_1 = arith.constant 0 : i32
    return %c0_i32, %c0_i32_0 : i32, i32
  }
  func.func @transform_7(%arg0: i32, %arg1: i32) -> (i32, i32) {
    %c0_i32 = arith.constant 0 : i32
    %c0_i32_0 = arith.constant 0 : i32
    %c0_i32_1 = arith.constant 0 : i32
    return %c0_i32, %c0_i32_0 : i32, i32
  }
  func.func @transform_8(%arg0: i32, %arg1: i32) -> (i32, i32) {
    %c0_i32 = arith.constant 0 : i32
    %c0_i32_0 = arith.constant 0 : i32
    return %arg0, %c0_i32 : i32, i32
  }
  func.func @transform_9(%arg0: i32, %arg1: i32) -> (i32, i32) {
    %c0_i32 = arith.constant 0 : i32
    %c0_i32_0 = arith.constant 0 : i32
    return %arg0, %c0_i32 : i32, i32
  }
}

</mosaic_0001>

<llo_original>
// kernel: gin_forward.2
$region0: #{gin_forward.2}
  #allocation0 [shape = 'u32[]', space=smem, size = 0x4, offset = 0x4, fixed_abs, tag = 'smem constant byte address 0x4 - core index']
  #allocation1 [shape = 'u32[144,128]{1,0:T(1,128)}', space=vmem, size = 0x12000, scoped, tag = 'internal scratch']
  #allocation2 [shape = 'f32[128,128]{1,0:T(8,128)}', space=vmem, size = 0x10000, scoped, tag = 'scratch operand']
  %s0 = inlined_call_operand.vmem [shape: bf16[128,128], index: 0, kind: input, shape index: {}]
  %s1 = inlined_call_operand.vmem [shape: bf16[128,128], index: 1, kind: input, shape index: {}]
  %s2 = inlined_call_operand.vmem [shape: bf16[128,128], index: 2, kind: input, shape index: {}]
  %s3 = inlined_call_operand.vmem [shape: f32[1,128], index: 3, kind: input, shape index: {}]
  %s4 = inlined_call_operand.vmem [shape: bf16[128,128], index: 4, kind: input, shape index: {}]
  %s5 = inlined_call_operand.vmem [shape: f32[1,128], index: 5, kind: input, shape index: {}]
  %s6 = inlined_call_operand.vmem [shape: f32[1,128], index: 6, kind: input, shape index: {}]
  %s7 = inlined_call_operand.vmem [shape: f32[1,128], index: 7, kind: input, shape index: {}]
  %s8 = inlined_call_operand.vmem [shape: bf16[128,128], index: 8, kind: output, shape index: {}]
  %s9 = sld [smem:[#allocation0]]
  $region50: #{gin_forward.2} parent=0
    _
  %s11 = ssub.s32 1, %s9
  %s12 = scalar_select 0, %s11, %s9
  // Predicated region
  $region2: #{gin_forward.2} parent=0 // pred_check
    _
  $region3: #{gin_forward.2} parent=0 // pred_check_branch
    %14 = sbr.rel (0) target = $region5
  $region4: #{gin_forward.2} parent=0 // pred_region
    _
  $region5: #{gin_forward.2} parent=0 // pred_fallthru
    _
  // Predicated region
  $region6: #{gin_forward.2} parent=0 // pred_check
    _
  $region7: #{gin_forward.2} parent=0 // pred_check_branch
    %16 = sbr.rel (0) target = $region9
  $region8: #{gin_forward.2} parent=0 // pred_region
    _
  $region9: #{gin_forward.2} parent=0 // pred_fallthru
    _
  // Predicated region
  $region10: #{gin_forward.2} parent=0 // pred_check
    _
  $region11: #{gin_forward.2} parent=0 // pred_check_branch
    %18 = sbr.rel (0) target = $region13
  $region12: #{gin_forward.2} parent=0 // pred_region
    _
  $region13: #{gin_forward.2} parent=0 // pred_fallthru
    _
  // Predicated region
  $region14: #{gin_forward.2} parent=0 // pred_check
    _
  $region15: #{gin_forward.2} parent=0 // pred_check_branch
    %20 = sbr.rel (0) target = $region17
  $region16: #{gin_forward.2} parent=0 // pred_region
    _
  $region17: #{gin_forward.2} parent=0 // pred_fallthru
    _
  // Predicated region
  $region18: #{gin_forward.2} parent=0 // pred_check
    _
  $region19: #{gin_forward.2} parent=0 // pred_check_branch
    %22 = sbr.rel (0) target = $region21
  $region20: #{gin_forward.2} parent=0 // pred_region
    _
  $region21: #{gin_forward.2} parent=0 // pred_fallthru
    _
  // Predicated region
  $region22: #{gin_forward.2} parent=0 // pred_check
    _
  $region23: #{gin_forward.2} parent=0 // pred_check_branch
    %24 = sbr.rel (0) target = $region25
  $region24: #{gin_forward.2} parent=0 // pred_region
    _
  $region25: #{gin_forward.2} parent=0 // pred_fallthru
    _
  // Predicated region
  $region26: #{gin_forward.2} parent=0 // pred_check
    _
  $region27: #{gin_forward.2} parent=0 // pred_check_branch
    %26 = sbr.rel (0) target = $region29
  $region28: #{gin_forward.2} parent=0 // pred_region
    _
  $region29: #{gin_forward.2} parent=0 // pred_fallthru
    _
  // Predicated region
  $region30: #{gin_forward.2} parent=0 // pred_check
    _
  $region31: #{gin_forward.2} parent=0 // pred_check_branch
    %28 = sbr.rel (0) target = $region33
  $region32: #{gin_forward.2} parent=0 // pred_region
    _
  $region33: #{gin_forward.2} parent=0 // pred_fallthru
    _
  %p30 = scmp.eq.s32.totalorder 0, 0
  // Predicated region
  $region34: #{gin_forward.2} parent=0 // pred_check
    %p31 = pneg %p30
  $region35: #{gin_forward.2} parent=0 // pred_check_branch
    %33 = sbr.rel (%p31) target = $region37
  $region36: #{gin_forward.2} parent=0 // pred_region
    %34 = vst [vmem:[#allocation2] sm:$0xff] 0.0
    %35 = vst [vmem:[#allocation2 + $0x8] sm:$0xff] 0.0
    %36 = vst [vmem:[#allocation2 + $0x10] sm:$0xff] 0.0
    %37 = vst [vmem:[#allocation2 + $0x18] sm:$0xff] 0.0
    %38 = vst [vmem:[#allocation2 + $0x20] sm:$0xff] 0.0
    %39 = vst [vmem:[#allocation2 + $0x28] sm:$0xff] 0.0
    %40 = vst [vmem:[#allocation2 + $0x30] sm:$0xff] 0.0
    %41 = vst [vmem:[#allocation2 + $0x38] sm:$0xff] 0.0
    %42 = vst [vmem:[#allocation2 + $0x40] sm:$0xff] 0.0
    %43 = vst [vmem:[#allocation2 + $0x48] sm:$0xff] 0.0
    %44 = vst [vmem:[#allocation2 + $0x50] sm:$0xff] 0.0
    %45 = vst [vmem:[#allocation2 + $0x58] sm:$0xff] 0.0
    %46 = vst [vmem:[#allocation2 + $0x60] sm:$0xff] 0.0
    %47 = vst [vmem:[#allocation2 + $0x68] sm:$0xff] 0.0
    %48 = vst [vmem:[#allocation2 + $0x70] sm:$0xff] 0.0
    %49 = vst [vmem:[#allocation2 + $0x78] sm:$0xff] 0.0
  $region37: #{gin_forward.2} parent=0 // pred_fallthru
    _
  %s50 = smul.u32 0, 128
  %s51 = sshra.s32 %s50, 3
  %s52 = sand.u32 %s50, 7
  %s53 = smul.addr %s51, 4
  %s54 = scalar_lea.vmem %s1, %s53
  %v55 = vld [vmem:[%s54] sm:$0xf]
  %v56 = vld [vmem:[%s54 + $0x4] sm:$0xf]
  %v57 = vld [vmem:[%s54 + $0x8] sm:$0xf]
  %v58 = vld [vmem:[%s54 + $0xc] sm:$0xf]
  %v59 = vld [vmem:[%s54 + $0x10] sm:$0xf]
  %v60 = vld [vmem:[%s54 + $0x14] sm:$0xf]
  %v61 = vld [vmem:[%s54 + $0x18] sm:$0xf]
  %v62 = vld [vmem:[%s54 + $0x1c] sm:$0xf]
  %v63 = vld [vmem:[%s54 + $0x20] sm:$0xf]
  %v64 = vld [vmem:[%s54 + $0x24] sm:$0xf]
  %v65 = vld [vmem:[%s54 + $0x28] sm:$0xf]
  %v66 = vld [vmem:[%s54 + $0x2c] sm:$0xf]
  %v67 = vld [vmem:[%s54 + $0x30] sm:$0xf]
  %v68 = vld [vmem:[%s54 + $0x34] sm:$0xf]
  %v69 = vld [vmem:[%s54 + $0x38] sm:$0xf]
  %v70 = vld [vmem:[%s54 + $0x3c] sm:$0xf]
  %v71 = vld [vmem:[#allocation2] sm:$0xff]
  %v72 = vld [vmem:[#allocation2 + $0x8] sm:$0xff]
  %v73 = vld [vmem:[#allocation2 + $0x10] sm:$0xff]
  %v74 = vld [vmem:[#allocation2 + $0x18] sm:$0xff]
  %v75 = vld [vmem:[#allocation2 + $0x20] sm:$0xff]
  %v76 = vld [vmem:[#allocation2 + $0x28] sm:$0xff]
  %v77 = vld [vmem:[#allocation2 + $0x30] sm:$0xff]
  %v78 = vld [vmem:[#allocation2 + $0x38] sm:$0xff]
  %v79 = vld [vmem:[#allocation2 + $0x40] sm:$0xff]
  %v80 = vld [vmem:[#allocation2 + $0x48] sm:$0xff]
  %v81 = vld [vmem:[#allocation2 + $0x50] sm:$0xff]
  %v82 = vld [vmem:[#allocation2 + $0x58] sm:$0xff]
  %v83 = vld [vmem:[#allocation2 + $0x60] sm:$0xff]
  %v84 = vld [vmem:[#allocation2 + $0x68] sm:$0xff]
  %v85 = vld [vmem:[#allocation2 + $0x70] sm:$0xff]
  %v86 = vld [vmem:[#allocation2 + $0x78] sm:$0xff]
  %v87 = vld [vmem:[%s0] sm:$0xf]
  %v88 = vld [vmem:[%s0 + $0x4] sm:$0xf]
  %v89 = vld [vmem:[%s0 + $0x8] sm:$0xf]
  %v90 = vld [vmem:[%s0 + $0xc] sm:$0xf]
  %v91 = vld [vmem:[%s0 + $0x10] sm:$0xf]
  %v92 = vld [vmem:[%s0 + $0x14] sm:$0xf]
  %v93 = vld [vmem:[%s0 + $0x18] sm:$0xf]
  %v94 = vld [vmem:[%s0 + $0x1c] sm:$0xf]
  %v95 = vld [vmem:[%s0 + $0x20] sm:$0xf]
  %v96 = vld [vmem:[%s0 + $0x24] sm:$0xf]
  %v97 = vld [vmem:[%s0 + $0x28] sm:$0xf]
  %v98 = vld [vmem:[%s0 + $0x2c] sm:$0xf]
  %v99 = vld [vmem:[%s0 + $0x30] sm:$0xf]
  %v100 = vld [vmem:[%s0 + $0x34] sm:$0xf]
  %v101 = vld [vmem:[%s0 + $0x38] sm:$0xf]
  %v102 = vld [vmem:[%s0 + $0x3c] sm:$0xf]
  %v119 = vunpack.c.l.b16 %v87
  %v120 = vunpack.c.l.b16 %v88
  %v121 = vunpack.c.l.b16 %v89
  %v122 = vunpack.c.l.b16 %v90
  %v123 = vunpack.c.l.b16 %v91
  %v124 = vunpack.c.l.b16 %v92
  %v125 = vunpack.c.l.b16 %v93
  %v126 = vunpack.c.l.b16 %v94
  %v127 = vunpack.c.l.b16 %v95
  %v128 = vunpack.c.l.b16 %v96
  %v129 = vunpack.c.l.b16 %v97
  %v130 = vunpack.c.l.b16 %v98
  %v131 = vunpack.c.l.b16 %v99
  %v132 = vunpack.c.l.b16 %v100
  %v133 = vunpack.c.l.b16 %v101
  %v134 = vunpack.c.l.b16 %v102
  %v135 = vpack.c.b16 %v120, %v119
  %v136 = vpack.c.b16 %v122, %v121
  %v137 = vpack.c.b16 %v124, %v123
  %v138 = vpack.c.b16 %v126, %v125
  %v139 = vpack.c.b16 %v128, %v127
  %v140 = vpack.c.b16 %v130, %v129
  %v141 = vpack.c.b16 %v132, %v131
  %v142 = vpack.c.b16 %v134, %v133
  %v167 = vunpack.c.l.b16 %v55
  %v168 = vunpack.c.l.b16 %v56
  %v169 = vunpack.c.l.b16 %v57
  %v170 = vunpack.c.l.b16 %v58
  %v171 = vunpack.c.l.b16 %v59
  %v172 = vunpack.c.l.b16 %v60
  %v173 = vunpack.c.l.b16 %v61
  %v174 = vunpack.c.l.b16 %v62
  %v175 = vunpack.c.l.b16 %v63
  %v176 = vunpack.c.l.b16 %v64
  %v177 = vunpack.c.l.b16 %v65
  %v178 = vunpack.c.l.b16 %v66
  %v179 = vunpack.c.l.b16 %v67
  %v180 = vunpack.c.l.b16 %v68
  %v181 = vunpack.c.l.b16 %v69
  %v182 = vunpack.c.l.b16 %v70
  %v183 = vpack.c.b16 %v168, %v167
  %v184 = vpack.c.b16 %v170, %v169
  %v185 = vpack.c.b16 %v172, %v171
  %v186 = vpack.c.b16 %v174, %v173
  %v187 = vpack.c.b16 %v176, %v175
  %v188 = vpack.c.b16 %v178, %v177
  %v189 = vpack.c.b16 %v180, %v179
  %v190 = vpack.c.b16 %v182, %v181
  %199 = vmatprep.subr.bf16.mxu0 0
  %200 = vmatpush1.bf16.msra.mxu0 %v190
  %201 = vmatprep.subr.bf16.mxu0 0
  %202 = vmatpush1.bf16.msra.mxu0 %v189
  %203 = vmatprep.subr.bf16.mxu0 0
  %204 = vmatpush1.bf16.msra.mxu0 %v188
  %205 = vmatprep.subr.bf16.mxu0 0
  %206 = vmatpush1.bf16.msra.mxu0 %v187
  %207 = vmatprep.subr.bf16.mxu0 0
  %208 = vmatpush1.bf16.msra.mxu0 %v186
  %209 = vmatprep.subr.bf16.mxu0 0
  %210 = vmatpush1.bf16.msra.mxu0 %v185
  %211 = vmatprep.subr.bf16.mxu0 0
  %212 = vmatpush1.bf16.msra.mxu0 %v184
  %213 = vmatprep.subr.bf16.mxu0 0
  %214 = vmatpush1.bf16.msra.mxu0 %v183
  %215 = vmatprep.subr.bf16.mxu0 0
  %216 = vmatpush2.bf16.msra.mxu0 0
  %217 = vmatprep.subr.bf16.mxu0 0
  %218 = vmatpush2.bf16.msra.mxu0 0
  %219 = vmatprep.subr.bf16.mxu0 0
  %220 = vmatpush2.bf16.msra.mxu0 0
  %221 = vmatprep.subr.bf16.mxu0 0
  %222 = vmatpush2.bf16.msra.mxu0 0
  %223 = vmatprep.subr.bf16.mxu0 0
  %224 = vmatpush2.bf16.msra.mxu0 0
  %225 = vmatprep.subr.bf16.mxu0 0
  %226 = vmatpush2.bf16.msra.mxu0 0
  %227 = vmatprep.subr.bf16.mxu0 0
  %228 = vmatpush2.bf16.msra.mxu0 0
  %229 = vmatprep.subr.bf16.mxu0 0
  %230 = vmatpush2.bf16.msra.mxu0 0
  %231 = vmatprep.mubr.bf16.mxu0 0
  %232 = vmatmul.mubr.bf16.gmra.mxu0 %v135
  %v233 = vpop.f32.mrf.mxu0
  %v234 = vadd.f32 0.0, %v233
  %v235 = vpop.f32.mrf.mxu0
  %v236 = vpop.f32.mrf.mxu0
  %v237 = vadd.f32 0.0, %v236
  %v238 = vpop.f32.mrf.mxu0
  %239 = vmatprep.mubr.bf16.mxu0 0
  %240 = vmatmul.mubr.bf16.gmra.mxu0 %v136
  %v241 = vpop.f32.mrf.mxu0
  %v242 = vadd.f32 0.0, %v241
  %v243 = vpop.f32.mrf.mxu0
  %v244 = vpop.f32.mrf.mxu0
  %v245 = vadd.f32 0.0, %v244
  %v246 = vpop.f32.mrf.mxu0
  %247 = vmatprep.mubr.bf16.mxu0 0
  %248 = vmatmul.mubr.bf16.gmra.mxu0 %v137
  %v249 = vpop.f32.mrf.mxu0
  %v250 = vadd.f32 0.0, %v249
  %v251 = vpop.f32.mrf.mxu0
  %v252 = vpop.f32.mrf.mxu0
  %v253 = vadd.f32 0.0, %v252
  %v254 = vpop.f32.mrf.mxu0
  %255 = vmatprep.mubr.bf16.mxu0 0
  %256 = vmatmul.mubr.bf16.gmra.mxu0 %v138
  %v257 = vpop.f32.mrf.mxu0
  %v258 = vadd.f32 0.0, %v257
  %v259 = vpop.f32.mrf.mxu0
  %v260 = vpop.f32.mrf.mxu0
  %v261 = vadd.f32 0.0, %v260
  %v262 = vpop.f32.mrf.mxu0
  %263 = vmatprep.mubr.bf16.mxu0 0
  %264 = vmatmul.mubr.bf16.gmra.mxu0 %v139
  %v265 = vpop.f32.mrf.mxu0
  %v266 = vadd.f32 0.0, %v265
  %v267 = vpop.f32.mrf.mxu0
  %v268 = vpop.f32.mrf.mxu0
  %v269 = vadd.f32 0.0, %v268
  %v270 = vpop.f32.mrf.mxu0
  %271 = vmatprep.mubr.bf16.mxu0 0
  %272 = vmatmul.mubr.bf16.gmra.mxu0 %v140
  %v273 = vpop.f32.mrf.mxu0
  %v274 = vadd.f32 0.0, %v273
  %v275 = vpop.f32.mrf.mxu0
  %v276 = vpop.f32.mrf.mxu0
  %v277 = vadd.f32 0.0, %v276
  %v278 = vpop.f32.mrf.mxu0
  %279 = vmatprep.mubr.bf16.mxu0 0
  %280 = vmatmul.mubr.bf16.gmra.mxu0 %v141
  %v281 = vpop.f32.mrf.mxu0
  %v282 = vadd.f32 0.0, %v281
  %v283 = vpop.f32.mrf.mxu0
  %v284 = vpop.f32.mrf.mxu0
  %v285 = vadd.f32 0.0, %v284
  %v286 = vpop.f32.mrf.mxu0
  %287 = vmatprep.mubr.bf16.mxu0 0
  %288 = vmatmul.mubr.bf16.gmra.mxu0 %v142
  %v289 = vpop.f32.mrf.mxu0
  %v290 = vadd.f32 0.0, %v289
  %v291 = vpop.f32.mrf.mxu0
  %v292 = vpop.f32.mrf.mxu0
  %v293 = vadd.f32 0.0, %v292
  %v294 = vpop.f32.mrf.mxu0
  %295 = vdwg.mxu0
  %v296 = vadd.f32 %v71, %v234
  %v297 = vadd.f32 %v72, %v237
  %v298 = vadd.f32 %v73, %v242
  %v299 = vadd.f32 %v74, %v245
  %v300 = vadd.f32 %v75, %v250
  %v301 = vadd.f32 %v76, %v253
  %v302 = vadd.f32 %v77, %v258
  %v303 = vadd.f32 %v78, %v261
  %v304 = vadd.f32 %v79, %v266
  %v305 = vadd.f32 %v80, %v269
  %v306 = vadd.f32 %v81, %v274
  %v307 = vadd.f32 %v82, %v277
  %v308 = vadd.f32 %v83, %v282
  %v309 = vadd.f32 %v84, %v285
  %v310 = vadd.f32 %v85, %v290
  %v311 = vadd.f32 %v86, %v293
  %312 = vst [vmem:[#allocation2] sm:$0xff] %v296
  %313 = vst [vmem:[#allocation2 + $0x8] sm:$0xff] %v297
  %314 = vst [vmem:[#allocation2 + $0x10] sm:$0xff] %v298
  %315 = vst [vmem:[#allocation2 + $0x18] sm:$0xff] %v299
  %316 = vst [vmem:[#allocation2 + $0x20] sm:$0xff] %v300
  %317 = vst [vmem:[#allocation2 + $0x28] sm:$0xff] %v301
  %318 = vst [vmem:[#allocation2 + $0x30] sm:$0xff] %v302
  %319 = vst [vmem:[#allocation2 + $0x38] sm:$0xff] %v303
  %320 = vst [vmem:[#allocation2 + $0x40] sm:$0xff] %v304
  %321 = vst [vmem:[#allocation2 + $0x48] sm:$0xff] %v305
  %322 = vst [vmem:[#allocation2 + $0x50] sm:$0xff] %v306
  %323 = vst [vmem:[#allocation2 + $0x58] sm:$0xff] %v307
  %324 = vst [vmem:[#allocation2 + $0x60] sm:$0xff] %v308
  %325 = vst [vmem:[#allocation2 + $0x68] sm:$0xff] %v309
  %326 = vst [vmem:[#allocation2 + $0x70] sm:$0xff] %v310
  %327 = vst [vmem:[#allocation2 + $0x78] sm:$0xff] %v311
  // Predicated region
  $region38: #{gin_forward.2} parent=0 // pred_check
    %p328 = pneg %p30
  $region39: #{gin_forward.2} parent=0 // pred_check_branch
    %330 = sbr.rel (%p328) target = $region41
  $region40: #{gin_forward.2} parent=0 // pred_region
    %v331 = vld [vmem:[#allocation2] sm:$0xff]
    %v332 = vld [vmem:[#allocation2 + $0x8] sm:$0xff]
    %v333 = vld [vmem:[#allocation2 + $0x10] sm:$0xff]
    %v334 = vld [vmem:[#allocation2 + $0x18] sm:$0xff]
    %v335 = vld [vmem:[#allocation2 + $0x20] sm:$0xff]
    %v336 = vld [vmem:[#allocation2 + $0x28] sm:$0xff]
    %v337 = vld [vmem:[#allocation2 + $0x30] sm:$0xff]
    %v338 = vld [vmem:[#allocation2 + $0x38] sm:$0xff]
    %v339 = vld [vmem:[#allocation2 + $0x40] sm:$0xff]
    %v340 = vld [vmem:[#allocation2 + $0x48] sm:$0xff]
    %v341 = vld [vmem:[#allocation2 + $0x50] sm:$0xff]
    %v342 = vld [vmem:[#allocation2 + $0x58] sm:$0xff]
    %v343 = vld [vmem:[#allocation2 + $0x60] sm:$0xff]
    %v344 = vld [vmem:[#allocation2 + $0x68] sm:$0xff]
    %v345 = vld [vmem:[#allocation2 + $0x70] sm:$0xff]
    %v346 = vld [vmem:[#allocation2 + $0x78] sm:$0xff]
    %v347 = vpack.c.bf16 %v332, %v331
    %v348 = vpack.c.bf16 %v334, %v333
    %v349 = vpack.c.bf16 %v336, %v335
    %v350 = vpack.c.bf16 %v338, %v337
    %v351 = vpack.c.bf16 %v340, %v339
    %v352 = vpack.c.bf16 %v342, %v341
    %v353 = vpack.c.bf16 %v344, %v343
    %v354 = vpack.c.bf16 %v346, %v345
    %v355 = vld [vmem:[%s2] sm:$0xf]
    %v356 = vld [vmem:[%s2 + $0x4] sm:$0xf]
    %v357 = vld [vmem:[%s2 + $0x8] sm:$0xf]
    %v358 = vld [vmem:[%s2 + $0xc] sm:$0xf]
    %v359 = vld [vmem:[%s2 + $0x10] sm:$0xf]
    %v360 = vld [vmem:[%s2 + $0x14] sm:$0xf]
    %v361 = vld [vmem:[%s2 + $0x18] sm:$0xf]
    %v362 = vld [vmem:[%s2 + $0x1c] sm:$0xf]
    %v363 = vld [vmem:[%s2 + $0x20] sm:$0xf]
    %v364 = vld [vmem:[%s2 + $0x24] sm:$0xf]
    %v365 = vld [vmem:[%s2 + $0x28] sm:$0xf]
    %v366 = vld [vmem:[%s2 + $0x2c] sm:$0xf]
    %v367 = vld [vmem:[%s2 + $0x30] sm:$0xf]
    %v368 = vld [vmem:[%s2 + $0x34] sm:$0xf]
    %v369 = vld [vmem:[%s2 + $0x38] sm:$0xf]
    %v370 = vld [vmem:[%s2 + $0x3c] sm:$0xf]
    %v371 = vld [vmem:[%s3] sm:$0x1]
    %v373 = vlaneseq
    %v374 = vshrl.u32 %v373, 7
    %v375 = vsub.s32 0, %v374
    %v376 = vrot.slane %v371, %v375
    %v394 = vunpack.c.l.b16 %v355
    %v395 = vunpack.c.l.b16 %v356
    %v396 = vunpack.c.l.b16 %v357
    %v397 = vunpack.c.l.b16 %v358
    %v398 = vunpack.c.l.b16 %v359
    %v399 = vunpack.c.l.b16 %v360
    %v400 = vunpack.c.l.b16 %v361
    %v401 = vunpack.c.l.b16 %v362
    %v402 = vunpack.c.l.b16 %v363
    %v403 = vunpack.c.l.b16 %v364
    %v404 = vunpack.c.l.b16 %v365
    %v405 = vunpack.c.l.b16 %v366
    %v406 = vunpack.c.l.b16 %v367
    %v407 = vunpack.c.l.b16 %v368
    %v408 = vunpack.c.l.b16 %v369
    %v409 = vunpack.c.l.b16 %v370
    %v410 = vpack.c.b16 %v395, %v394
    %v411 = vpack.c.b16 %v397, %v396
    %v412 = vpack.c.b16 %v399, %v398
    %v413 = vpack.c.b16 %v401, %v400
    %v414 = vpack.c.b16 %v403, %v402
    %v415 = vpack.c.b16 %v405, %v404
    %v416 = vpack.c.b16 %v407, %v406
    %v417 = vpack.c.b16 %v409, %v408
    %426 = vmatprep.subr.bf16.mxu0 0
    %427 = vmatpush1.bf16.msra.mxu0 %v417
    %428 = vmatprep.subr.bf16.mxu0 0
    %429 = vmatpush1.bf16.msra.mxu0 %v416
    %430 = vmatprep.subr.bf16.mxu0 0
    %431 = vmatpush1.bf16.msra.mxu0 %v415
    %432 = vmatprep.subr.bf16.mxu0 0
    %433 = vmatpush1.bf16.msra.mxu0 %v414
    %434 = vmatprep.subr.bf16.mxu0 0
    %435 = vmatpush1.bf16.msra.mxu0 %v413
    %436 = vmatprep.subr.bf16.mxu0 0
    %437 = vmatpush1.bf16.msra.mxu0 %v412
    %438 = vmatprep.subr.bf16.mxu0 0
    %439 = vmatpush1.bf16.msra.mxu0 %v411
    %440 = vmatprep.subr.bf16.mxu0 0
    %441 = vmatpush1.bf16.msra.mxu0 %v410
    %442 = vmatprep.subr.bf16.mxu0 0
    %443 = vmatpush2.bf16.msra.mxu0 0
    %444 = vmatprep.subr.bf16.mxu0 0
    %445 = vmatpush2.bf16.msra.mxu0 0
    %446 = vmatprep.subr.bf16.mxu0 0
    %447 = vmatpush2.bf16.msra.mxu0 0
    %448 = vmatprep.subr.bf16.mxu0 0
    %449 = vmatpush2.bf16.msra.mxu0 0
    %450 = vmatprep.subr.bf16.mxu0 0
    %451 = vmatpush2.bf16.msra.mxu0 0
    %452 = vmatprep.subr.bf16.mxu0 0
    %453 = vmatpush2.bf16.msra.mxu0 0
    %454 = vmatprep.subr.bf16.mxu0 0
    %455 = vmatpush2.bf16.msra.mxu0 0
    %456 = vmatprep.subr.bf16.mxu0 0
    %457 = vmatpush2.bf16.msra.mxu0 0
    %458 = vmatprep.mubr.bf16.mxu0 0
    %459 = vmatmul.mubr.bf16.gmra.mxu0 %v347
    %v460 = vpop.f32.mrf.mxu0
    %v461 = vadd.f32 %v376, %v460
    %v462 = vpop.f32.mrf.mxu0
    %v463 = vpop.f32.mrf.mxu0
    %v464 = vadd.f32 %v376, %v463
    %v465 = vpop.f32.mrf.mxu0
    %466 = vmatprep.mubr.bf16.mxu0 0
    %467 = vmatmul.mubr.bf16.gmra.mxu0 %v348
    %v468 = vpop.f32.mrf.mxu0
    %v469 = vadd.f32 %v376, %v468
    %v470 = vpop.f32.mrf.mxu0
    %v471 = vpop.f32.mrf.mxu0
    %v472 = vadd.f32 %v376, %v471
    %v473 = vpop.f32.mrf.mxu0
    %474 = vmatprep.mubr.bf16.mxu0 0
    %475 = vmatmul.mubr.bf16.gmra.mxu0 %v349
    %v476 = vpop.f32.mrf.mxu0
    %v477 = vadd.f32 %v376, %v476
    %v478 = vpop.f32.mrf.mxu0
    %v479 = vpop.f32.mrf.mxu0
    %v480 = vadd.f32 %v376, %v479
    %v481 = vpop.f32.mrf.mxu0
    %482 = vmatprep.mubr.bf16.mxu0 0
    %483 = vmatmul.mubr.bf16.gmra.mxu0 %v350
    %v484 = vpop.f32.mrf.mxu0
    %v485 = vadd.f32 %v376, %v484
    %v486 = vpop.f32.mrf.mxu0
    %v487 = vpop.f32.mrf.mxu0
    %v488 = vadd.f32 %v376, %v487
    %v489 = vpop.f32.mrf.mxu0
    %490 = vmatprep.mubr.bf16.mxu0 0
    %491 = vmatmul.mubr.bf16.gmra.mxu0 %v351
    %v492 = vpop.f32.mrf.mxu0
    %v493 = vadd.f32 %v376, %v492
    %v494 = vpop.f32.mrf.mxu0
    %v495 = vpop.f32.mrf.mxu0
    %v496 = vadd.f32 %v376, %v495
    %v497 = vpop.f32.mrf.mxu0
    %498 = vmatprep.mubr.bf16.mxu0 0
    %499 = vmatmul.mubr.bf16.gmra.mxu0 %v352
    %v500 = vpop.f32.mrf.mxu0
    %v501 = vadd.f32 %v376, %v500
    %v502 = vpop.f32.mrf.mxu0
    %v503 = vpop.f32.mrf.mxu0
    %v504 = vadd.f32 %v376, %v503
    %v505 = vpop.f32.mrf.mxu0
    %506 = vmatprep.mubr.bf16.mxu0 0
    %507 = vmatmul.mubr.bf16.gmra.mxu0 %v353
    %v508 = vpop.f32.mrf.mxu0
    %v509 = vadd.f32 %v376, %v508
    %v510 = vpop.f32.mrf.mxu0
    %v511 = vpop.f32.mrf.mxu0
    %v512 = vadd.f32 %v376, %v511
    %v513 = vpop.f32.mrf.mxu0
    %514 = vmatprep.mubr.bf16.mxu0 0
    %515 = vmatmul.mubr.bf16.gmra.mxu0 %v354
    %v516 = vpop.f32.mrf.mxu0
    %v517 = vadd.f32 %v376, %v516
    %v518 = vpop.f32.mrf.mxu0
    %v519 = vpop.f32.mrf.mxu0
    %v520 = vadd.f32 %v376, %v519
    %v521 = vpop.f32.mrf.mxu0
    %522 = vdwg.mxu0
    %v523 = vmax.f32 %v461, 0.0
    %v524 = vmax.f32 %v464, 0.0
    %v525 = vmax.f32 %v469, 0.0
    %v526 = vmax.f32 %v472, 0.0
    %v527 = vmax.f32 %v477, 0.0
    %v528 = vmax.f32 %v480, 0.0
    %v529 = vmax.f32 %v485, 0.0
    %v530 = vmax.f32 %v488, 0.0
    %v531 = vmax.f32 %v493, 0.0
    %v532 = vmax.f32 %v496, 0.0
    %v533 = vmax.f32 %v501, 0.0
    %v534 = vmax.f32 %v504, 0.0
    %v535 = vmax.f32 %v509, 0.0
    %v536 = vmax.f32 %v512, 0.0
    %v537 = vmax.f32 %v517, 0.0
    %v538 = vmax.f32 %v520, 0.0
    %v539 = vpack.c.bf16 %v524, %v523
    %v540 = vpack.c.bf16 %v526, %v525
    %v541 = vpack.c.bf16 %v528, %v527
    %v542 = vpack.c.bf16 %v530, %v529
    %v543 = vpack.c.bf16 %v532, %v531
    %v544 = vpack.c.bf16 %v534, %v533
    %v545 = vpack.c.bf16 %v536, %v535
    %v546 = vpack.c.bf16 %v538, %v537
    %v547 = vld [vmem:[%s4] sm:$0xf]
    %v548 = vld [vmem:[%s4 + $0x4] sm:$0xf]
    %v549 = vld [vmem:[%s4 + $0x8] sm:$0xf]
    %v550 = vld [vmem:[%s4 + $0xc] sm:$0xf]
    %v551 = vld [vmem:[%s4 + $0x10] sm:$0xf]
    %v552 = vld [vmem:[%s4 + $0x14] sm:$0xf]
    %v553 = vld [vmem:[%s4 + $0x18] sm:$0xf]
    %v554 = vld [vmem:[%s4 + $0x1c] sm:$0xf]
    %v555 = vld [vmem:[%s4 + $0x20] sm:$0xf]
    %v556 = vld [vmem:[%s4 + $0x24] sm:$0xf]
    %v557 = vld [vmem:[%s4 + $0x28] sm:$0xf]
    %v558 = vld [vmem:[%s4 + $0x2c] sm:$0xf]
    %v559 = vld [vmem:[%s4 + $0x30] sm:$0xf]
    %v560 = vld [vmem:[%s4 + $0x34] sm:$0xf]
    %v561 = vld [vmem:[%s4 + $0x38] sm:$0xf]
    %v562 = vld [vmem:[%s4 + $0x3c] sm:$0xf]
    %v563 = vld [vmem:[%s5] sm:$0x1]
    %v565 = vlaneseq
    %v566 = vshrl.u32 %v565, 7
    %v567 = vsub.s32 0, %v566
    %v568 = vrot.slane %v563, %v567
    %v586 = vunpack.c.l.b16 %v547
    %v587 = vunpack.c.l.b16 %v548
    %v588 = vunpack.c.l.b16 %v549
    %v589 = vunpack.c.l.b16 %v550
    %v590 = vunpack.c.l.b16 %v551
    %v591 = vunpack.c.l.b16 %v552
    %v592 = vunpack.c.l.b16 %v553
    %v593 = vunpack.c.l.b16 %v554
    %v594 = vunpack.c.l.b16 %v555
    %v595 = vunpack.c.l.b16 %v556
    %v596 = vunpack.c.l.b16 %v557
    %v597 = vunpack.c.l.b16 %v558
    %v598 = vunpack.c.l.b16 %v559
    %v599 = vunpack.c.l.b16 %v560
    %v600 = vunpack.c.l.b16 %v561
    %v601 = vunpack.c.l.b16 %v562
    %v602 = vpack.c.b16 %v587, %v586
    %v603 = vpack.c.b16 %v589, %v588
    %v604 = vpack.c.b16 %v591, %v590
    %v605 = vpack.c.b16 %v593, %v592
    %v606 = vpack.c.b16 %v595, %v594
    %v607 = vpack.c.b16 %v597, %v596
    %v608 = vpack.c.b16 %v599, %v598
    %v609 = vpack.c.b16 %v601, %v600
    %618 = vmatprep.subr.bf16.mxu0 0
    %619 = vmatpush1.bf16.msra.mxu0 %v609
    %620 = vmatprep.subr.bf16.mxu0 0
    %621 = vmatpush1.bf16.msra.mxu0 %v608
    %622 = vmatprep.subr.bf16.mxu0 0
    %623 = vmatpush1.bf16.msra.mxu0 %v607
    %624 = vmatprep.subr.bf16.mxu0 0
    %625 = vmatpush1.bf16.msra.mxu0 %v606
    %626 = vmatprep.subr.bf16.mxu0 0
    %627 = vmatpush1.bf16.msra.mxu0 %v605
    %628 = vmatprep.subr.bf16.mxu0 0
    %629 = vmatpush1.bf16.msra.mxu0 %v604
    %630 = vmatprep.subr.bf16.mxu0 0
    %631 = vmatpush1.bf16.msra.mxu0 %v603
    %632 = vmatprep.subr.bf16.mxu0 0
    %633 = vmatpush1.bf16.msra.mxu0 %v602
    %634 = vmatprep.subr.bf16.mxu0 0
    %635 = vmatpush2.bf16.msra.mxu0 0
    %636 = vmatprep.subr.bf16.mxu0 0
    %637 = vmatpush2.bf16.msra.mxu0 0
    %638 = vmatprep.subr.bf16.mxu0 0
    %639 = vmatpush2.bf16.msra.mxu0 0
    %640 = vmatprep.subr.bf16.mxu0 0
    %641 = vmatpush2.bf16.msra.mxu0 0
    %642 = vmatprep.subr.bf16.mxu0 0
    %643 = vmatpush2.bf16.msra.mxu0 0
    %644 = vmatprep.subr.bf16.mxu0 0
    %645 = vmatpush2.bf16.msra.mxu0 0
    %646 = vmatprep.subr.bf16.mxu0 0
    %647 = vmatpush2.bf16.msra.mxu0 0
    %648 = vmatprep.subr.bf16.mxu0 0
    %649 = vmatpush2.bf16.msra.mxu0 0
    %650 = vmatprep.mubr.bf16.mxu0 0
    %651 = vmatmul.mubr.bf16.gmra.mxu0 %v539
    %v652 = vpop.f32.mrf.mxu0
    %v653 = vadd.f32 %v568, %v652
    %v654 = vpop.f32.mrf.mxu0
    %v655 = vpop.f32.mrf.mxu0
    %v656 = vadd.f32 %v568, %v655
    %v657 = vpop.f32.mrf.mxu0
    %658 = vmatprep.mubr.bf16.mxu0 0
    %659 = vmatmul.mubr.bf16.gmra.mxu0 %v540
    %v660 = vpop.f32.mrf.mxu0
    %v661 = vadd.f32 %v568, %v660
    %v662 = vpop.f32.mrf.mxu0
    %v663 = vpop.f32.mrf.mxu0
    %v664 = vadd.f32 %v568, %v663
    %v665 = vpop.f32.mrf.mxu0
    %666 = vmatprep.mubr.bf16.mxu0 0
    %667 = vmatmul.mubr.bf16.gmra.mxu0 %v541
    %v668 = vpop.f32.mrf.mxu0
    %v669 = vadd.f32 %v568, %v668
    %v670 = vpop.f32.mrf.mxu0
    %v671 = vpop.f32.mrf.mxu0
    %v672 = vadd.f32 %v568, %v671
    %v673 = vpop.f32.mrf.mxu0
    %674 = vmatprep.mubr.bf16.mxu0 0
    %675 = vmatmul.mubr.bf16.gmra.mxu0 %v542
    %v676 = vpop.f32.mrf.mxu0
    %v677 = vadd.f32 %v568, %v676
    %v678 = vpop.f32.mrf.mxu0
    %v679 = vpop.f32.mrf.mxu0
    %v680 = vadd.f32 %v568, %v679
    %v681 = vpop.f32.mrf.mxu0
    %682 = vmatprep.mubr.bf16.mxu0 0
    %683 = vmatmul.mubr.bf16.gmra.mxu0 %v543
    %v684 = vpop.f32.mrf.mxu0
    %v685 = vadd.f32 %v568, %v684
    %v686 = vpop.f32.mrf.mxu0
    %v687 = vpop.f32.mrf.mxu0
    %v688 = vadd.f32 %v568, %v687
    %v689 = vpop.f32.mrf.mxu0
    %690 = vmatprep.mubr.bf16.mxu0 0
    %691 = vmatmul.mubr.bf16.gmra.mxu0 %v544
    %v692 = vpop.f32.mrf.mxu0
    %v693 = vadd.f32 %v568, %v692
    %v694 = vpop.f32.mrf.mxu0
    %v695 = vpop.f32.mrf.mxu0
    %v696 = vadd.f32 %v568, %v695
    %v697 = vpop.f32.mrf.mxu0
    %698 = vmatprep.mubr.bf16.mxu0 0
    %699 = vmatmul.mubr.bf16.gmra.mxu0 %v545
    %v700 = vpop.f32.mrf.mxu0
    %v701 = vadd.f32 %v568, %v700
    %v702 = vpop.f32.mrf.mxu0
    %v703 = vpop.f32.mrf.mxu0
    %v704 = vadd.f32 %v568, %v703
    %v705 = vpop.f32.mrf.mxu0
    %706 = vmatprep.mubr.bf16.mxu0 0
    %707 = vmatmul.mubr.bf16.gmra.mxu0 %v546
    %v708 = vpop.f32.mrf.mxu0
    %v709 = vadd.f32 %v568, %v708
    %v710 = vpop.f32.mrf.mxu0
    %v711 = vpop.f32.mrf.mxu0
    %v712 = vadd.f32 %v568, %v711
    %v713 = vpop.f32.mrf.mxu0
    %714 = vdwg.mxu0
    %v715 = vmax.f32 %v653, 0.0
    %v716 = vmax.f32 %v656, 0.0
    %v717 = vmax.f32 %v661, 0.0
    %v718 = vmax.f32 %v664, 0.0
    %v719 = vmax.f32 %v669, 0.0
    %v720 = vmax.f32 %v672, 0.0
    %v721 = vmax.f32 %v677, 0.0
    %v722 = vmax.f32 %v680, 0.0
    %v723 = vmax.f32 %v685, 0.0
    %v724 = vmax.f32 %v688, 0.0
    %v725 = vmax.f32 %v693, 0.0
    %v726 = vmax.f32 %v696, 0.0
    %v727 = vmax.f32 %v701, 0.0
    %v728 = vmax.f32 %v704, 0.0
    %v729 = vmax.f32 %v709, 0.0
    %v730 = vmax.f32 %v712, 0.0
    %v731 = vld [vmem:[%s6] sm:$0x1]
    %v733 = vlaneseq
    %v734 = vshrl.u32 %v733, 7
    %v735 = vsub.s32 0, %v734
    %v736 = vrot.slane %v731, %v735
    %v738 = vmul.f32 %v715, %v736
    %v739 = vmul.f32 %v716, %v736
    %v740 = vmul.f32 %v717, %v736
    %v741 = vmul.f32 %v718, %v736
    %v742 = vmul.f32 %v719, %v736
    %v743 = vmul.f32 %v720, %v736
    %v744 = vmul.f32 %v721, %v736
    %v745 = vmul.f32 %v722, %v736
    %v746 = vmul.f32 %v723, %v736
    %v747 = vmul.f32 %v724, %v736
    %v748 = vmul.f32 %v725, %v736
    %v749 = vmul.f32 %v726, %v736
    %v750 = vmul.f32 %v727, %v736
    %v751 = vmul.f32 %v728, %v736
    %v752 = vmul.f32 %v729, %v736
    %v753 = vmul.f32 %v730, %v736
    %v754 = vld [vmem:[%s7] sm:$0x1]
    %v756 = vlaneseq
    %v757 = vshrl.u32 %v756, 7
    %v758 = vsub.s32 0, %v757
    %v759 = vrot.slane %v754, %v758
    %v761 = vadd.f32 %v738, %v759
    %v762 = vadd.f32 %v739, %v759
    %v763 = vadd.f32 %v740, %v759
    %v764 = vadd.f32 %v741, %v759
    %v765 = vadd.f32 %v742, %v759
    %v766 = vadd.f32 %v743, %v759
    %v767 = vadd.f32 %v744, %v759
    %v768 = vadd.f32 %v745, %v759
    %v769 = vadd.f32 %v746, %v759
    %v770 = vadd.f32 %v747, %v759
    %v771 = vadd.f32 %v748, %v759
    %v772 = vadd.f32 %v749, %v759
    %v773 = vadd.f32 %v750, %v759
    %v774 = vadd.f32 %v751, %v759
    %v775 = vadd.f32 %v752, %v759
    %v776 = vadd.f32 %v753, %v759
    %v777 = vpack.c.bf16 %v762, %v761
    %v778 = vpack.c.bf16 %v764, %v763
    %v779 = vpack.c.bf16 %v766, %v765
    %v780 = vpack.c.bf16 %v768, %v767
    %v781 = vpack.c.bf16 %v770, %v769
    %v782 = vpack.c.bf16 %v772, %v771
    %v783 = vpack.c.bf16 %v774, %v773
    %v784 = vpack.c.bf16 %v776, %v775
    %v793 = vunpack.c.l.b16 %v777
    %v794 = vunpack.c.h.b16 %v777
    %v795 = vunpack.c.l.b16 %v778
    %v796 = vunpack.c.h.b16 %v778
    %v797 = vunpack.c.l.b16 %v779
    %v798 = vunpack.c.h.b16 %v779
    %v799 = vunpack.c.l.b16 %v780
    %v800 = vunpack.c.h.b16 %v780
    %v801 = vunpack.c.l.b16 %v781
    %v802 = vunpack.c.h.b16 %v781
    %v803 = vunpack.c.l.b16 %v782
    %v804 = vunpack.c.h.b16 %v782
    %v805 = vunpack.c.l.b16 %v783
    %v806 = vunpack.c.h.b16 %v783
    %v807 = vunpack.c.l.b16 %v784
    %v808 = vunpack.c.h.b16 %v784
    %v809 = vpack.c.b16 %v793, %v793
    %v810 = vpack.c.b16 %v794, %v794
    %v811 = vpack.c.b16 %v795, %v795
    %v812 = vpack.c.b16 %v796, %v796
    %v813 = vpack.c.b16 %v797, %v797
    %v814 = vpack.c.b16 %v798, %v798
    %v815 = vpack.c.b16 %v799, %v799
    %v816 = vpack.c.b16 %v800, %v800
    %v817 = vpack.c.b16 %v801, %v801
    %v818 = vpack.c.b16 %v802, %v802
    %v819 = vpack.c.b16 %v803, %v803
    %v820 = vpack.c.b16 %v804, %v804
    %v821 = vpack.c.b16 %v805, %v805
    %v822 = vpack.c.b16 %v806, %v806
    %v823 = vpack.c.b16 %v807, %v807
    %v824 = vpack.c.b16 %v808, %v808
    %841 = vst [vmem:[%s8] sm:$0xf] %v809
    %842 = vst [vmem:[%s8 + $0x4] sm:$0xf] %v810
    %843 = vst [vmem:[%s8 + $0x8] sm:$0xf] %v811
    %844 = vst [vmem:[%s8 + $0xc] sm:$0xf] %v812
    %845 = vst [vmem:[%s8 + $0x10] sm:$0xf] %v813
    %846 = vst [vmem:[%s8 + $0x14] sm:$0xf] %v814
    %847 = vst [vmem:[%s8 + $0x18] sm:$0xf] %v815
    %848 = vst [vmem:[%s8 + $0x1c] sm:$0xf] %v816
    %849 = vst [vmem:[%s8 + $0x20] sm:$0xf] %v817
    %850 = vst [vmem:[%s8 + $0x24] sm:$0xf] %v818
    %851 = vst [vmem:[%s8 + $0x28] sm:$0xf] %v819
    %852 = vst [vmem:[%s8 + $0x2c] sm:$0xf] %v820
    %853 = vst [vmem:[%s8 + $0x30] sm:$0xf] %v821
    %854 = vst [vmem:[%s8 + $0x34] sm:$0xf] %v822
    %855 = vst [vmem:[%s8 + $0x38] sm:$0xf] %v823
    %856 = vst [vmem:[%s8 + $0x3c] sm:$0xf] %v824
  $region41: #{gin_forward.2} parent=0 // pred_fallthru
    _
  // Predicated region
  $region42: #{gin_forward.2} parent=0 // pred_check
    _
  $region43: #{gin_forward.2} parent=0 // pred_check_branch
    %858 = sbr.rel (0) target = $region45
  $region44: #{gin_forward.2} parent=0 // pred_region
    _
  $region45: #{gin_forward.2} parent=0 // pred_fallthru
    _
  // Predicated region
  $region46: #{gin_forward.2} parent=0 // pred_check
    _
  $region47: #{gin_forward.2} parent=0 // pred_check_branch
    %860 = sbr.rel (0) target = $region49
  $region48: #{gin_forward.2} parent=0 // pred_region
    _
  $region49: #{gin_forward.2} parent=0 // pred_fallthru
    _

// kernel: gin_forward.3
$region0: #{gin_forward.3}
  #allocation0 [shape = 'u32[]', space=smem, size = 0x4, offset = 0x4, fixed_abs, tag = 'smem constant byte address 0x4 - core index']
  #allocation1 [shape = 'u32[144,128]{1,0:T(1,128)}', space=vmem, size = 0x12000, scoped, tag = 'internal scratch']
  #allocation2 [shape = 'f32[128,128]{1,0:T(8,128)}', space=vmem, size = 0x10000, scoped, tag = 'scratch operand']
  %s0 = inlined_call_operand.vmem [shape: bf16[128,128], index: 0, kind: input, shape index: {}]
  %s1 = inlined_call_operand.vmem [shape: bf16[128,128], index: 1, kind: input, shape index: {}]
  %s2 = inlined_call_operand.vmem [shape: bf16[128,128], index: 2, kind: input, shape index: {}]
  %s3 = inlined_call_operand.vmem [shape: f32[1,128], index: 3, kind: input, shape index: {}]
  %s4 = inlined_call_operand.vmem [shape: bf16[128,128], index: 4, kind: input, shape index: {}]
  %s5 = inlined_call_operand.vmem [shape: f32[1,128], index: 5, kind: input, shape index: {}]
  %s6 = inlined_call_operand.vmem [shape: f32[1,128], index: 6, kind: input, shape index: {}]
  %s7 = inlined_call_operand.vmem [shape: f32[1,128], index: 7, kind: input, shape index: {}]
  %s8 = inlined_call_operand.vmem [shape: f32[128,128], index: 8, kind: output, shape index: {0}]
  %s9 = inlined_call_operand.vmem [shape: f32[128,128], index: 9, kind: output, shape index: {1}]
  %10 = xla_tuple %s8, %s9
  %s11 = sld [smem:[#allocation0]]
  $region58: #{gin_forward.3} parent=0
    _
  %s13 = ssub.s32 1, %s11
  %s14 = scalar_select 0, %s13, %s11
  // Predicated region
  $region2: #{gin_forward.3} parent=0 // pred_check
    _
  $region3: #{gin_forward.3} parent=0 // pred_check_branch
    %16 = sbr.rel (0) target = $region5
  $region4: #{gin_forward.3} parent=0 // pred_region
    _
  $region5: #{gin_forward.3} parent=0 // pred_fallthru
    _
  // Predicated region
  $region6: #{gin_forward.3} parent=0 // pred_check
    _
  $region7: #{gin_forward.3} parent=0 // pred_check_branch
    %18 = sbr.rel (0) target = $region9
  $region8: #{gin_forward.3} parent=0 // pred_region
    _
  $region9: #{gin_forward.3} parent=0 // pred_fallthru
    _
  // Predicated region
  $region10: #{gin_forward.3} parent=0 // pred_check
    _
  $region11: #{gin_forward.3} parent=0 // pred_check_branch
    %20 = sbr.rel (0) target = $region13
  $region12: #{gin_forward.3} parent=0 // pred_region
    _
  $region13: #{gin_forward.3} parent=0 // pred_fallthru
    _
  // Predicated region
  $region14: #{gin_forward.3} parent=0 // pred_check
    _
  $region15: #{gin_forward.3} parent=0 // pred_check_branch
    %22 = sbr.rel (0) target = $region17
  $region16: #{gin_forward.3} parent=0 // pred_region
    _
  $region17: #{gin_forward.3} parent=0 // pred_fallthru
    _
  // Predicated region
  $region18: #{gin_forward.3} parent=0 // pred_check
    _
  $region19: #{gin_forward.3} parent=0 // pred_check_branch
    %24 = sbr.rel (0) target = $region21
  $region20: #{gin_forward.3} parent=0 // pred_region
    _
  $region21: #{gin_forward.3} parent=0 // pred_fallthru
    _
  // Predicated region
  $region22: #{gin_forward.3} parent=0 // pred_check
    _
  $region23: #{gin_forward.3} parent=0 // pred_check_branch
    %26 = sbr.rel (0) target = $region25
  $region24: #{gin_forward.3} parent=0 // pred_region
    _
  $region25: #{gin_forward.3} parent=0 // pred_fallthru
    _
  // Predicated region
  $region26: #{gin_forward.3} parent=0 // pred_check
    _
  $region27: #{gin_forward.3} parent=0 // pred_check_branch
    %28 = sbr.rel (0) target = $region29
  $region28: #{gin_forward.3} parent=0 // pred_region
    _
  $region29: #{gin_forward.3} parent=0 // pred_fallthru
    _
  // Predicated region
  $region30: #{gin_forward.3} parent=0 // pred_check
    _
  $region31: #{gin_forward.3} parent=0 // pred_check_branch
    %30 = sbr.rel (0) target = $region33
  $region32: #{gin_forward.3} parent=0 // pred_region
    _
  $region33: #{gin_forward.3} parent=0 // pred_fallthru
    _
  %p32 = scmp.eq.s32.totalorder 0, 0
  // Predicated region
  $region34: #{gin_forward.3} parent=0 // pred_check
    %p33 = pneg %p32
  $region35: #{gin_forward.3} parent=0 // pred_check_branch
    %35 = sbr.rel (%p33) target = $region37
  $region36: #{gin_forward.3} parent=0 // pred_region
    %36 = vst [vmem:[#allocation2] sm:$0xff] 0.0
    %37 = vst [vmem:[#allocation2 + $0x8] sm:$0xff] 0.0
    %38 = vst [vmem:[#allocation2 + $0x10] sm:$0xff] 0.0
    %39 = vst [vmem:[#allocation2 + $0x18] sm:$0xff] 0.0
    %40 = vst [vmem:[#allocation2 + $0x20] sm:$0xff] 0.0
    %41 = vst [vmem:[#allocation2 + $0x28] sm:$0xff] 0.0
    %42 = vst [vmem:[#allocation2 + $0x30] sm:$0xff] 0.0
    %43 = vst [vmem:[#allocation2 + $0x38] sm:$0xff] 0.0
    %44 = vst [vmem:[#allocation2 + $0x40] sm:$0xff] 0.0
    %45 = vst [vmem:[#allocation2 + $0x48] sm:$0xff] 0.0
    %46 = vst [vmem:[#allocation2 + $0x50] sm:$0xff] 0.0
    %47 = vst [vmem:[#allocation2 + $0x58] sm:$0xff] 0.0
    %48 = vst [vmem:[#allocation2 + $0x60] sm:$0xff] 0.0
    %49 = vst [vmem:[#allocation2 + $0x68] sm:$0xff] 0.0
    %50 = vst [vmem:[#allocation2 + $0x70] sm:$0xff] 0.0
    %51 = vst [vmem:[#allocation2 + $0x78] sm:$0xff] 0.0
  $region37: #{gin_forward.3} parent=0 // pred_fallthru
    _
  %s52 = smul.u32 0, 128
  %s53 = sshra.s32 %s52, 3
  %s54 = sand.u32 %s52, 7
  %s55 = smul.addr %s53, 4
  %s56 = scalar_lea.vmem %s1, %s55
  %v57 = vld [vmem:[%s56] sm:$0xf]
  %v58 = vld [vmem:[%s56 + $0x4] sm:$0xf]
  %v59 = vld [vmem:[%s56 + $0x8] sm:$0xf]
  %v60 = vld [vmem:[%s56 + $0xc] sm:$0xf]
  %v61 = vld [vmem:[%s56 + $0x10] sm:$0xf]
  %v62 = vld [vmem:[%s56 + $0x14] sm:$0xf]
  %v63 = vld [vmem:[%s56 + $0x18] sm:$0xf]
  %v64 = vld [vmem:[%s56 + $0x1c] sm:$0xf]
  %v65 = vld [vmem:[%s56 + $0x20] sm:$0xf]
  %v66 = vld [vmem:[%s56 + $0x24] sm:$0xf]
  %v67 = vld [vmem:[%s56 + $0x28] sm:$0xf]
  %v68 = vld [vmem:[%s56 + $0x2c] sm:$0xf]
  %v69 = vld [vmem:[%s56 + $0x30] sm:$0xf]
  %v70 = vld [vmem:[%s56 + $0x34] sm:$0xf]
  %v71 = vld [vmem:[%s56 + $0x38] sm:$0xf]
  %v72 = vld [vmem:[%s56 + $0x3c] sm:$0xf]
  %v73 = vld [vmem:[#allocation2] sm:$0xff]
  %v74 = vld [vmem:[#allocation2 + $0x8] sm:$0xff]
  %v75 = vld [vmem:[#allocation2 + $0x10] sm:$0xff]
  %v76 = vld [vmem:[#allocation2 + $0x18] sm:$0xff]
  %v77 = vld [vmem:[#allocation2 + $0x20] sm:$0xff]
  %v78 = vld [vmem:[#allocation2 + $0x28] sm:$0xff]
  %v79 = vld [vmem:[#allocation2 + $0x30] sm:$0xff]
  %v80 = vld [vmem:[#allocation2 + $0x38] sm:$0xff]
  %v81 = vld [vmem:[#allocation2 + $0x40] sm:$0xff]
  %v82 = vld [vmem:[#allocation2 + $0x48] sm:$0xff]
  %v83 = vld [vmem:[#allocation2 + $0x50] sm:$0xff]
  %v84 = vld [vmem:[#allocation2 + $0x58] sm:$0xff]
  %v85 = vld [vmem:[#allocation2 + $0x60] sm:$0xff]
  %v86 = vld [vmem:[#allocation2 + $0x68] sm:$0xff]
  %v87 = vld [vmem:[#allocation2 + $0x70] sm:$0xff]
  %v88 = vld [vmem:[#allocation2 + $0x78] sm:$0xff]
  %v89 = vld [vmem:[%s0] sm:$0xf]
  %v90 = vld [vmem:[%s0 + $0x4] sm:$0xf]
  %v91 = vld [vmem:[%s0 + $0x8] sm:$0xf]
  %v92 = vld [vmem:[%s0 + $0xc] sm:$0xf]
  %v93 = vld [vmem:[%s0 + $0x10] sm:$0xf]
  %v94 = vld [vmem:[%s0 + $0x14] sm:$0xf]
  %v95 = vld [vmem:[%s0 + $0x18] sm:$0xf]
  %v96 = vld [vmem:[%s0 + $0x1c] sm:$0xf]
  %v97 = vld [vmem:[%s0 + $0x20] sm:$0xf]
  %v98 = vld [vmem:[%s0 + $0x24] sm:$0xf]
  %v99 = vld [vmem:[%s0 + $0x28] sm:$0xf]
  %v100 = vld [vmem:[%s0 + $0x2c] sm:$0xf]
  %v101 = vld [vmem:[%s0 + $0x30] sm:$0xf]
  %v102 = vld [vmem:[%s0 + $0x34] sm:$0xf]
  %v103 = vld [vmem:[%s0 + $0x38] sm:$0xf]
  %v104 = vld [vmem:[%s0 + $0x3c] sm:$0xf]
  %v121 = vunpack.c.l.b16 %v89
  %v122 = vunpack.c.l.b16 %v90
  %v123 = vunpack.c.l.b16 %v91
  %v124 = vunpack.c.l.b16 %v92
  %v125 = vunpack.c.l.b16 %v93
  %v126 = vunpack.c.l.b16 %v94
  %v127 = vunpack.c.l.b16 %v95
  %v128 = vunpack.c.l.b16 %v96
  %v129 = vunpack.c.l.b16 %v97
  %v130 = vunpack.c.l.b16 %v98
  %v131 = vunpack.c.l.b16 %v99
  %v132 = vunpack.c.l.b16 %v100
  %v133 = vunpack.c.l.b16 %v101
  %v134 = vunpack.c.l.b16 %v102
  %v135 = vunpack.c.l.b16 %v103
  %v136 = vunpack.c.l.b16 %v104
  %v137 = vpack.c.b16 %v122, %v121
  %v138 = vpack.c.b16 %v124, %v123
  %v139 = vpack.c.b16 %v126, %v125
  %v140 = vpack.c.b16 %v128, %v127
  %v141 = vpack.c.b16 %v130, %v129
  %v142 = vpack.c.b16 %v132, %v131
  %v143 = vpack.c.b16 %v134, %v133
  %v144 = vpack.c.b16 %v136, %v135
  %v169 = vunpack.c.l.b16 %v57
  %v170 = vunpack.c.l.b16 %v58
  %v171 = vunpack.c.l.b16 %v59
  %v172 = vunpack.c.l.b16 %v60
  %v173 = vunpack.c.l.b16 %v61
  %v174 = vunpack.c.l.b16 %v62
  %v175 = vunpack.c.l.b16 %v63
  %v176 = vunpack.c.l.b16 %v64
  %v177 = vunpack.c.l.b16 %v65
  %v178 = vunpack.c.l.b16 %v66
  %v179 = vunpack.c.l.b16 %v67
  %v180 = vunpack.c.l.b16 %v68
  %v181 = vunpack.c.l.b16 %v69
  %v182 = vunpack.c.l.b16 %v70
  %v183 = vunpack.c.l.b16 %v71
  %v184 = vunpack.c.l.b16 %v72
  %v185 = vpack.c.b16 %v170, %v169
  %v186 = vpack.c.b16 %v172, %v171
  %v187 = vpack.c.b16 %v174, %v173
  %v188 = vpack.c.b16 %v176, %v175
  %v189 = vpack.c.b16 %v178, %v177
  %v190 = vpack.c.b16 %v180, %v179
  %v191 = vpack.c.b16 %v182, %v181
  %v192 = vpack.c.b16 %v184, %v183
  %201 = vmatprep.subr.bf16.mxu0 0
  %202 = vmatpush1.bf16.msra.mxu0 %v192
  %203 = vmatprep.subr.bf16.mxu0 0
  %204 = vmatpush1.bf16.msra.mxu0 %v191
  %205 = vmatprep.subr.bf16.mxu0 0
  %206 = vmatpush1.bf16.msra.mxu0 %v190
  %207 = vmatprep.subr.bf16.mxu0 0
  %208 = vmatpush1.bf16.msra.mxu0 %v189
  %209 = vmatprep.subr.bf16.mxu0 0
  %210 = vmatpush1.bf16.msra.mxu0 %v188
  %211 = vmatprep.subr.bf16.mxu0 0
  %212 = vmatpush1.bf16.msra.mxu0 %v187
  %213 = vmatprep.subr.bf16.mxu0 0
  %214 = vmatpush1.bf16.msra.mxu0 %v186
  %215 = vmatprep.subr.bf16.mxu0 0
  %216 = vmatpush1.bf16.msra.mxu0 %v185
  %217 = vmatprep.subr.bf16.mxu0 0
  %218 = vmatpush2.bf16.msra.mxu0 0
  %219 = vmatprep.subr.bf16.mxu0 0
  %220 = vmatpush2.bf16.msra.mxu0 0
  %221 = vmatprep.subr.bf16.mxu0 0
  %222 = vmatpush2.bf16.msra.mxu0 0
  %223 = vmatprep.subr.bf16.mxu0 0
  %224 = vmatpush2.bf16.msra.mxu0 0
  %225 = vmatprep.subr.bf16.mxu0 0
  %226 = vmatpush2.bf16.msra.mxu0 0
  %227 = vmatprep.subr.bf16.mxu0 0
  %228 = vmatpush2.bf16.msra.mxu0 0
  %229 = vmatprep.subr.bf16.mxu0 0
  %230 = vmatpush2.bf16.msra.mxu0 0
  %231 = vmatprep.subr.bf16.mxu0 0
  %232 = vmatpush2.bf16.msra.mxu0 0
  %233 = vmatprep.mubr.bf16.mxu0 0
  %234 = vmatmul.mubr.bf16.gmra.mxu0 %v137
  %v235 = vpop.f32.mrf.mxu0
  %v236 = vadd.f32 0.0, %v235
  %v237 = vpop.f32.mrf.mxu0
  %v238 = vpop.f32.mrf.mxu0
  %v239 = vadd.f32 0.0, %v238
  %v240 = vpop.f32.mrf.mxu0
  %241 = vmatprep.mubr.bf16.mxu0 0
  %242 = vmatmul.mubr.bf16.gmra.mxu0 %v138
  %v243 = vpop.f32.mrf.mxu0
  %v244 = vadd.f32 0.0, %v243
  %v245 = vpop.f32.mrf.mxu0
  %v246 = vpop.f32.mrf.mxu0
  %v247 = vadd.f32 0.0, %v246
  %v248 = vpop.f32.mrf.mxu0
  %249 = vmatprep.mubr.bf16.mxu0 0
  %250 = vmatmul.mubr.bf16.gmra.mxu0 %v139
  %v251 = vpop.f32.mrf.mxu0
  %v252 = vadd.f32 0.0, %v251
  %v253 = vpop.f32.mrf.mxu0
  %v254 = vpop.f32.mrf.mxu0
  %v255 = vadd.f32 0.0, %v254
  %v256 = vpop.f32.mrf.mxu0
  %257 = vmatprep.mubr.bf16.mxu0 0
  %258 = vmatmul.mubr.bf16.gmra.mxu0 %v140
  %v259 = vpop.f32.mrf.mxu0
  %v260 = vadd.f32 0.0, %v259
  %v261 = vpop.f32.mrf.mxu0
  %v262 = vpop.f32.mrf.mxu0
  %v263 = vadd.f32 0.0, %v262
  %v264 = vpop.f32.mrf.mxu0
  %265 = vmatprep.mubr.bf16.mxu0 0
  %266 = vmatmul.mubr.bf16.gmra.mxu0 %v141
  %v267 = vpop.f32.mrf.mxu0
  %v268 = vadd.f32 0.0, %v267
  %v269 = vpop.f32.mrf.mxu0
  %v270 = vpop.f32.mrf.mxu0
  %v271 = vadd.f32 0.0, %v270
  %v272 = vpop.f32.mrf.mxu0
  %273 = vmatprep.mubr.bf16.mxu0 0
  %274 = vmatmul.mubr.bf16.gmra.mxu0 %v142
  %v275 = vpop.f32.mrf.mxu0
  %v276 = vadd.f32 0.0, %v275
  %v277 = vpop.f32.mrf.mxu0
  %v278 = vpop.f32.mrf.mxu0
  %v279 = vadd.f32 0.0, %v278
  %v280 = vpop.f32.mrf.mxu0
  %281 = vmatprep.mubr.bf16.mxu0 0
  %282 = vmatmul.mubr.bf16.gmra.mxu0 %v143
  %v283 = vpop.f32.mrf.mxu0
  %v284 = vadd.f32 0.0, %v283
  %v285 = vpop.f32.mrf.mxu0
  %v286 = vpop.f32.mrf.mxu0
  %v287 = vadd.f32 0.0, %v286
  %v288 = vpop.f32.mrf.mxu0
  %289 = vmatprep.mubr.bf16.mxu0 0
  %290 = vmatmul.mubr.bf16.gmra.mxu0 %v144
  %v291 = vpop.f32.mrf.mxu0
  %v292 = vadd.f32 0.0, %v291
  %v293 = vpop.f32.mrf.mxu0
  %v294 = vpop.f32.mrf.mxu0
  %v295 = vadd.f32 0.0, %v294
  %v296 = vpop.f32.mrf.mxu0
  %297 = vdwg.mxu0
  %v298 = vadd.f32 %v73, %v236
  %v299 = vadd.f32 %v74, %v239
  %v300 = vadd.f32 %v75, %v244
  %v301 = vadd.f32 %v76, %v247
  %v302 = vadd.f32 %v77, %v252
  %v303 = vadd.f32 %v78, %v255
  %v304 = vadd.f32 %v79, %v260
  %v305 = vadd.f32 %v80, %v263
  %v306 = vadd.f32 %v81, %v268
  %v307 = vadd.f32 %v82, %v271
  %v308 = vadd.f32 %v83, %v276
  %v309 = vadd.f32 %v84, %v279
  %v310 = vadd.f32 %v85, %v284
  %v311 = vadd.f32 %v86, %v287
  %v312 = vadd.f32 %v87, %v292
  %v313 = vadd.f32 %v88, %v295
  %314 = vst [vmem:[#allocation2] sm:$0xff] %v298
  %315 = vst [vmem:[#allocation2 + $0x8] sm:$0xff] %v299
  %316 = vst [vmem:[#allocation2 + $0x10] sm:$0xff] %v300
  %317 = vst [vmem:[#allocation2 + $0x18] sm:$0xff] %v301
  %318 = vst [vmem:[#allocation2 + $0x20] sm:$0xff] %v302
  %319 = vst [vmem:[#allocation2 + $0x28] sm:$0xff] %v303
  %320 = vst [vmem:[#allocation2 + $0x30] sm:$0xff] %v304
  %321 = vst [vmem:[#allocation2 + $0x38] sm:$0xff] %v305
  %322 = vst [vmem:[#allocation2 + $0x40] sm:$0xff] %v306
  %323 = vst [vmem:[#allocation2 + $0x48] sm:$0xff] %v307
  %324 = vst [vmem:[#allocation2 + $0x50] sm:$0xff] %v308
  %325 = vst [vmem:[#allocation2 + $0x58] sm:$0xff] %v309
  %326 = vst [vmem:[#allocation2 + $0x60] sm:$0xff] %v310
  %327 = vst [vmem:[#allocation2 + $0x68] sm:$0xff] %v311
  %328 = vst [vmem:[#allocation2 + $0x70] sm:$0xff] %v312
  %329 = vst [vmem:[#allocation2 + $0x78] sm:$0xff] %v313
  // Predicated region
  $region38: #{gin_forward.3} parent=0 // pred_check
    %p330 = pneg %p32
  $region39: #{gin_forward.3} parent=0 // pred_check_branch
    %332 = sbr.rel (%p330) target = $region41
  $region40: #{gin_forward.3} parent=0 // pred_region
    %v333 = vld [vmem:[#allocation2] sm:$0xff]
    %v334 = vld [vmem:[#allocation2 + $0x8] sm:$0xff]
    %v335 = vld [vmem:[#allocation2 + $0x10] sm:$0xff]
    %v336 = vld [vmem:[#allocation2 + $0x18] sm:$0xff]
    %v337 = vld [vmem:[#allocation2 + $0x20] sm:$0xff]
    %v338 = vld [vmem:[#allocation2 + $0x28] sm:$0xff]
    %v339 = vld [vmem:[#allocation2 + $0x30] sm:$0xff]
    %v340 = vld [vmem:[#allocation2 + $0x38] sm:$0xff]
    %v341 = vld [vmem:[#allocation2 + $0x40] sm:$0xff]
    %v342 = vld [vmem:[#allocation2 + $0x48] sm:$0xff]
    %v343 = vld [vmem:[#allocation2 + $0x50] sm:$0xff]
    %v344 = vld [vmem:[#allocation2 + $0x58] sm:$0xff]
    %v345 = vld [vmem:[#allocation2 + $0x60] sm:$0xff]
    %v346 = vld [vmem:[#allocation2 + $0x68] sm:$0xff]
    %v347 = vld [vmem:[#allocation2 + $0x70] sm:$0xff]
    %v348 = vld [vmem:[#allocation2 + $0x78] sm:$0xff]
    %v349 = vpack.c.bf16 %v334, %v333
    %v350 = vpack.c.bf16 %v336, %v335
    %v351 = vpack.c.bf16 %v338, %v337
    %v352 = vpack.c.bf16 %v340, %v339
    %v353 = vpack.c.bf16 %v342, %v341
    %v354 = vpack.c.bf16 %v344, %v343
    %v355 = vpack.c.bf16 %v346, %v345
    %v356 = vpack.c.bf16 %v348, %v347
    %v357 = vld [vmem:[%s2] sm:$0xf]
    %v358 = vld [vmem:[%s2 + $0x4] sm:$0xf]
    %v359 = vld [vmem:[%s2 + $0x8] sm:$0xf]
    %v360 = vld [vmem:[%s2 + $0xc] sm:$0xf]
    %v361 = vld [vmem:[%s2 + $0x10] sm:$0xf]
    %v362 = vld [vmem:[%s2 + $0x14] sm:$0xf]
    %v363 = vld [vmem:[%s2 + $0x18] sm:$0xf]
    %v364 = vld [vmem:[%s2 + $0x1c] sm:$0xf]
    %v365 = vld [vmem:[%s2 + $0x20] sm:$0xf]
    %v366 = vld [vmem:[%s2 + $0x24] sm:$0xf]
    %v367 = vld [vmem:[%s2 + $0x28] sm:$0xf]
    %v368 = vld [vmem:[%s2 + $0x2c] sm:$0xf]
    %v369 = vld [vmem:[%s2 + $0x30] sm:$0xf]
    %v370 = vld [vmem:[%s2 + $0x34] sm:$0xf]
    %v371 = vld [vmem:[%s2 + $0x38] sm:$0xf]
    %v372 = vld [vmem:[%s2 + $0x3c] sm:$0xf]
    %v373 = vld [vmem:[%s3] sm:$0x1]
    %v375 = vlaneseq
    %v376 = vshrl.u32 %v375, 7
    %v377 = vsub.s32 0, %v376
    %v378 = vrot.slane %v373, %v377
    %v396 = vunpack.c.l.b16 %v357
    %v397 = vunpack.c.l.b16 %v358
    %v398 = vunpack.c.l.b16 %v359
    %v399 = vunpack.c.l.b16 %v360
    %v400 = vunpack.c.l.b16 %v361
    %v401 = vunpack.c.l.b16 %v362
    %v402 = vunpack.c.l.b16 %v363
    %v403 = vunpack.c.l.b16 %v364
    %v404 = vunpack.c.l.b16 %v365
    %v405 = vunpack.c.l.b16 %v366
    %v406 = vunpack.c.l.b16 %v367
    %v407 = vunpack.c.l.b16 %v368
    %v408 = vunpack.c.l.b16 %v369
    %v409 = vunpack.c.l.b16 %v370
    %v410 = vunpack.c.l.b16 %v371
    %v411 = vunpack.c.l.b16 %v372
    %v412 = vpack.c.b16 %v397, %v396
    %v413 = vpack.c.b16 %v399, %v398
    %v414 = vpack.c.b16 %v401, %v400
    %v415 = vpack.c.b16 %v403, %v402
    %v416 = vpack.c.b16 %v405, %v404
    %v417 = vpack.c.b16 %v407, %v406
    %v418 = vpack.c.b16 %v409, %v408
    %v419 = vpack.c.b16 %v411, %v410
    %428 = vmatprep.subr.bf16.mxu0 0
    %429 = vmatpush1.bf16.msra.mxu0 %v419
    %430 = vmatprep.subr.bf16.mxu0 0
    %431 = vmatpush1.bf16.msra.mxu0 %v418
    %432 = vmatprep.subr.bf16.mxu0 0
    %433 = vmatpush1.bf16.msra.mxu0 %v417
    %434 = vmatprep.subr.bf16.mxu0 0
    %435 = vmatpush1.bf16.msra.mxu0 %v416
    %436 = vmatprep.subr.bf16.mxu0 0
    %437 = vmatpush1.bf16.msra.mxu0 %v415
    %438 = vmatprep.subr.bf16.mxu0 0
    %439 = vmatpush1.bf16.msra.mxu0 %v414
    %440 = vmatprep.subr.bf16.mxu0 0
    %441 = vmatpush1.bf16.msra.mxu0 %v413
    %442 = vmatprep.subr.bf16.mxu0 0
    %443 = vmatpush1.bf16.msra.mxu0 %v412
    %444 = vmatprep.subr.bf16.mxu0 0
    %445 = vmatpush2.bf16.msra.mxu0 0
    %446 = vmatprep.subr.bf16.mxu0 0
    %447 = vmatpush2.bf16.msra.mxu0 0
    %448 = vmatprep.subr.bf16.mxu0 0
    %449 = vmatpush2.bf16.msra.mxu0 0
    %450 = vmatprep.subr.bf16.mxu0 0
    %451 = vmatpush2.bf16.msra.mxu0 0
    %452 = vmatprep.subr.bf16.mxu0 0
    %453 = vmatpush2.bf16.msra.mxu0 0
    %454 = vmatprep.subr.bf16.mxu0 0
    %455 = vmatpush2.bf16.msra.mxu0 0
    %456 = vmatprep.subr.bf16.mxu0 0
    %457 = vmatpush2.bf16.msra.mxu0 0
    %458 = vmatprep.subr.bf16.mxu0 0
    %459 = vmatpush2.bf16.msra.mxu0 0
    %460 = vmatprep.mubr.bf16.mxu0 0
    %461 = vmatmul.mubr.bf16.gmra.mxu0 %v349
    %v462 = vpop.f32.mrf.mxu0
    %v463 = vadd.f32 %v378, %v462
    %v464 = vpop.f32.mrf.mxu0
    %v465 = vpop.f32.mrf.mxu0
    %v466 = vadd.f32 %v378, %v465
    %v467 = vpop.f32.mrf.mxu0
    %468 = vmatprep.mubr.bf16.mxu0 0
    %469 = vmatmul.mubr.bf16.gmra.mxu0 %v350
    %v470 = vpop.f32.mrf.mxu0
    %v471 = vadd.f32 %v378, %v470
    %v472 = vpop.f32.mrf.mxu0
    %v473 = vpop.f32.mrf.mxu0
    %v474 = vadd.f32 %v378, %v473
    %v475 = vpop.f32.mrf.mxu0
    %476 = vmatprep.mubr.bf16.mxu0 0
    %477 = vmatmul.mubr.bf16.gmra.mxu0 %v351
    %v478 = vpop.f32.mrf.mxu0
    %v479 = vadd.f32 %v378, %v478
    %v480 = vpop.f32.mrf.mxu0
    %v481 = vpop.f32.mrf.mxu0
    %v482 = vadd.f32 %v378, %v481
    %v483 = vpop.f32.mrf.mxu0
    %484 = vmatprep.mubr.bf16.mxu0 0
    %485 = vmatmul.mubr.bf16.gmra.mxu0 %v352
    %v486 = vpop.f32.mrf.mxu0
    %v487 = vadd.f32 %v378, %v486
    %v488 = vpop.f32.mrf.mxu0
    %v489 = vpop.f32.mrf.mxu0
    %v490 = vadd.f32 %v378, %v489
    %v491 = vpop.f32.mrf.mxu0
    %492 = vmatprep.mubr.bf16.mxu0 0
    %493 = vmatmul.mubr.bf16.gmra.mxu0 %v353
    %v494 = vpop.f32.mrf.mxu0
    %v495 = vadd.f32 %v378, %v494
    %v496 = vpop.f32.mrf.mxu0
    %v497 = vpop.f32.mrf.mxu0
    %v498 = vadd.f32 %v378, %v497
    %v499 = vpop.f32.mrf.mxu0
    %500 = vmatprep.mubr.bf16.mxu0 0
    %501 = vmatmul.mubr.bf16.gmra.mxu0 %v354
    %v502 = vpop.f32.mrf.mxu0
    %v503 = vadd.f32 %v378, %v502
    %v504 = vpop.f32.mrf.mxu0
    %v505 = vpop.f32.mrf.mxu0
    %v506 = vadd.f32 %v378, %v505
    %v507 = vpop.f32.mrf.mxu0
    %508 = vmatprep.mubr.bf16.mxu0 0
    %509 = vmatmul.mubr.bf16.gmra.mxu0 %v355
    %v510 = vpop.f32.mrf.mxu0
    %v511 = vadd.f32 %v378, %v510
    %v512 = vpop.f32.mrf.mxu0
    %v513 = vpop.f32.mrf.mxu0
    %v514 = vadd.f32 %v378, %v513
    %v515 = vpop.f32.mrf.mxu0
    %516 = vmatprep.mubr.bf16.mxu0 0
    %517 = vmatmul.mubr.bf16.gmra.mxu0 %v356
    %v518 = vpop.f32.mrf.mxu0
    %v519 = vadd.f32 %v378, %v518
    %v520 = vpop.f32.mrf.mxu0
    %v521 = vpop.f32.mrf.mxu0
    %v522 = vadd.f32 %v378, %v521
    %v523 = vpop.f32.mrf.mxu0
    %524 = vdwg.mxu0
    %v525 = vmax.f32 %v463, 0.0
    %v526 = vmax.f32 %v466, 0.0
    %v527 = vmax.f32 %v471, 0.0
    %v528 = vmax.f32 %v474, 0.0
    %v529 = vmax.f32 %v479, 0.0
    %v530 = vmax.f32 %v482, 0.0
    %v531 = vmax.f32 %v487, 0.0
    %v532 = vmax.f32 %v490, 0.0
    %v533 = vmax.f32 %v495, 0.0
    %v534 = vmax.f32 %v498, 0.0
    %v535 = vmax.f32 %v503, 0.0
    %v536 = vmax.f32 %v506, 0.0
    %v537 = vmax.f32 %v511, 0.0
    %v538 = vmax.f32 %v514, 0.0
    %v539 = vmax.f32 %v519, 0.0
    %v540 = vmax.f32 %v522, 0.0
    %v541 = vpack.c.bf16 %v526, %v525
    %v542 = vpack.c.bf16 %v528, %v527
    %v543 = vpack.c.bf16 %v530, %v529
    %v544 = vpack.c.bf16 %v532, %v531
    %v545 = vpack.c.bf16 %v534, %v533
    %v546 = vpack.c.bf16 %v536, %v535
    %v547 = vpack.c.bf16 %v538, %v537
    %v548 = vpack.c.bf16 %v540, %v539
    %v549 = vld [vmem:[%s4] sm:$0xf]
    %v550 = vld [vmem:[%s4 + $0x4] sm:$0xf]
    %v551 = vld [vmem:[%s4 + $0x8] sm:$0xf]
    %v552 = vld [vmem:[%s4 + $0xc] sm:$0xf]
    %v553 = vld [vmem:[%s4 + $0x10] sm:$0xf]
    %v554 = vld [vmem:[%s4 + $0x14] sm:$0xf]
    %v555 = vld [vmem:[%s4 + $0x18] sm:$0xf]
    %v556 = vld [vmem:[%s4 + $0x1c] sm:$0xf]
    %v557 = vld [vmem:[%s4 + $0x20] sm:$0xf]
    %v558 = vld [vmem:[%s4 + $0x24] sm:$0xf]
    %v559 = vld [vmem:[%s4 + $0x28] sm:$0xf]
    %v560 = vld [vmem:[%s4 + $0x2c] sm:$0xf]
    %v561 = vld [vmem:[%s4 + $0x30] sm:$0xf]
    %v562 = vld [vmem:[%s4 + $0x34] sm:$0xf]
    %v563 = vld [vmem:[%s4 + $0x38] sm:$0xf]
    %v564 = vld [vmem:[%s4 + $0x3c] sm:$0xf]
    %v565 = vld [vmem:[%s5] sm:$0x1]
    %v567 = vlaneseq
    %v568 = vshrl.u32 %v567, 7
    %v569 = vsub.s32 0, %v568
    %v570 = vrot.slane %v565, %v569
    %v588 = vunpack.c.l.b16 %v549
    %v589 = vunpack.c.l.b16 %v550
    %v590 = vunpack.c.l.b16 %v551
    %v591 = vunpack.c.l.b16 %v552
    %v592 = vunpack.c.l.b16 %v553
    %v593 = vunpack.c.l.b16 %v554
    %v594 = vunpack.c.l.b16 %v555
    %v595 = vunpack.c.l.b16 %v556
    %v596 = vunpack.c.l.b16 %v557
    %v597 = vunpack.c.l.b16 %v558
    %v598 = vunpack.c.l.b16 %v559
    %v599 = vunpack.c.l.b16 %v560
    %v600 = vunpack.c.l.b16 %v561
    %v601 = vunpack.c.l.b16 %v562
    %v602 = vunpack.c.l.b16 %v563
    %v603 = vunpack.c.l.b16 %v564
    %v604 = vpack.c.b16 %v589, %v588
    %v605 = vpack.c.b16 %v591, %v590
    %v606 = vpack.c.b16 %v593, %v592
    %v607 = vpack.c.b16 %v595, %v594
    %v608 = vpack.c.b16 %v597, %v596
    %v609 = vpack.c.b16 %v599, %v598
    %v610 = vpack.c.b16 %v601, %v600
    %v611 = vpack.c.b16 %v603, %v602
    %620 = vmatprep.subr.bf16.mxu0 0
    %621 = vmatpush1.bf16.msra.mxu0 %v611
    %622 = vmatprep.subr.bf16.mxu0 0
    %623 = vmatpush1.bf16.msra.mxu0 %v610
    %624 = vmatprep.subr.bf16.mxu0 0
    %625 = vmatpush1.bf16.msra.mxu0 %v609
    %626 = vmatprep.subr.bf16.mxu0 0
    %627 = vmatpush1.bf16.msra.mxu0 %v608
    %628 = vmatprep.subr.bf16.mxu0 0
    %629 = vmatpush1.bf16.msra.mxu0 %v607
    %630 = vmatprep.subr.bf16.mxu0 0
    %631 = vmatpush1.bf16.msra.mxu0 %v606
    %632 = vmatprep.subr.bf16.mxu0 0
    %633 = vmatpush1.bf16.msra.mxu0 %v605
    %634 = vmatprep.subr.bf16.mxu0 0
    %635 = vmatpush1.bf16.msra.mxu0 %v604
    %636 = vmatprep.subr.bf16.mxu0 0
    %637 = vmatpush2.bf16.msra.mxu0 0
    %638 = vmatprep.subr.bf16.mxu0 0
    %639 = vmatpush2.bf16.msra.mxu0 0
    %640 = vmatprep.subr.bf16.mxu0 0
    %641 = vmatpush2.bf16.msra.mxu0 0
    %642 = vmatprep.subr.bf16.mxu0 0
    %643 = vmatpush2.bf16.msra.mxu0 0
    %644 = vmatprep.subr.bf16.mxu0 0
    %645 = vmatpush2.bf16.msra.mxu0 0
    %646 = vmatprep.subr.bf16.mxu0 0
    %647 = vmatpush2.bf16.msra.mxu0 0
    %648 = vmatprep.subr.bf16.mxu0 0
    %649 = vmatpush2.bf16.msra.mxu0 0
    %650 = vmatprep.subr.bf16.mxu0 0
    %651 = vmatpush2.bf16.msra.mxu0 0
    %652 = vmatprep.mubr.bf16.mxu0 0
    %653 = vmatmul.mubr.bf16.gmra.mxu0 %v541
    %v654 = vpop.f32.mrf.mxu0
    %v655 = vadd.f32 %v570, %v654
    %v656 = vpop.f32.mrf.mxu0
    %v657 = vpop.f32.mrf.mxu0
    %v658 = vadd.f32 %v570, %v657
    %v659 = vpop.f32.mrf.mxu0
    %660 = vmatprep.mubr.bf16.mxu0 0
    %661 = vmatmul.mubr.bf16.gmra.mxu0 %v542
    %v662 = vpop.f32.mrf.mxu0
    %v663 = vadd.f32 %v570, %v662
    %v664 = vpop.f32.mrf.mxu0
    %v665 = vpop.f32.mrf.mxu0
    %v666 = vadd.f32 %v570, %v665
    %v667 = vpop.f32.mrf.mxu0
    %668 = vmatprep.mubr.bf16.mxu0 0
    %669 = vmatmul.mubr.bf16.gmra.mxu0 %v543
    %v670 = vpop.f32.mrf.mxu0
    %v671 = vadd.f32 %v570, %v670
    %v672 = vpop.f32.mrf.mxu0
    %v673 = vpop.f32.mrf.mxu0
    %v674 = vadd.f32 %v570, %v673
    %v675 = vpop.f32.mrf.mxu0
    %676 = vmatprep.mubr.bf16.mxu0 0
    %677 = vmatmul.mubr.bf16.gmra.mxu0 %v544
    %v678 = vpop.f32.mrf.mxu0
    %v679 = vadd.f32 %v570, %v678
    %v680 = vpop.f32.mrf.mxu0
    %v681 = vpop.f32.mrf.mxu0
    %v682 = vadd.f32 %v570, %v681
    %v683 = vpop.f32.mrf.mxu0
    %684 = vmatprep.mubr.bf16.mxu0 0
    %685 = vmatmul.mubr.bf16.gmra.mxu0 %v545
    %v686 = vpop.f32.mrf.mxu0
    %v687 = vadd.f32 %v570, %v686
    %v688 = vpop.f32.mrf.mxu0
    %v689 = vpop.f32.mrf.mxu0
    %v690 = vadd.f32 %v570, %v689
    %v691 = vpop.f32.mrf.mxu0
    %692 = vmatprep.mubr.bf16.mxu0 0
    %693 = vmatmul.mubr.bf16.gmra.mxu0 %v546
    %v694 = vpop.f32.mrf.mxu0
    %v695 = vadd.f32 %v570, %v694
    %v696 = vpop.f32.mrf.mxu0
    %v697 = vpop.f32.mrf.mxu0
    %v698 = vadd.f32 %v570, %v697
    %v699 = vpop.f32.mrf.mxu0
    %700 = vmatprep.mubr.bf16.mxu0 0
    %701 = vmatmul.mubr.bf16.gmra.mxu0 %v547
    %v702 = vpop.f32.mrf.mxu0
    %v703 = vadd.f32 %v570, %v702
    %v704 = vpop.f32.mrf.mxu0
    %v705 = vpop.f32.mrf.mxu0
    %v706 = vadd.f32 %v570, %v705
    %v707 = vpop.f32.mrf.mxu0
    %708 = vmatprep.mubr.bf16.mxu0 0
    %709 = vmatmul.mubr.bf16.gmra.mxu0 %v548
    %v710 = vpop.f32.mrf.mxu0
    %v711 = vadd.f32 %v570, %v710
    %v712 = vpop.f32.mrf.mxu0
    %v713 = vpop.f32.mrf.mxu0
    %v714 = vadd.f32 %v570, %v713
    %v715 = vpop.f32.mrf.mxu0
    %716 = vdwg.mxu0
    %v717 = vmax.f32 %v655, 0.0
    %v718 = vmax.f32 %v658, 0.0
    %v719 = vmax.f32 %v663, 0.0
    %v720 = vmax.f32 %v666, 0.0
    %v721 = vmax.f32 %v671, 0.0
    %v722 = vmax.f32 %v674, 0.0
    %v723 = vmax.f32 %v679, 0.0
    %v724 = vmax.f32 %v682, 0.0
    %v725 = vmax.f32 %v687, 0.0
    %v726 = vmax.f32 %v690, 0.0
    %v727 = vmax.f32 %v695, 0.0
    %v728 = vmax.f32 %v698, 0.0
    %v729 = vmax.f32 %v703, 0.0
    %v730 = vmax.f32 %v706, 0.0
    %v731 = vmax.f32 %v711, 0.0
    %v732 = vmax.f32 %v714, 0.0
    %v733 = vld [vmem:[%s6] sm:$0x1]
    %v735 = vlaneseq
    %v736 = vshrl.u32 %v735, 7
    %v737 = vsub.s32 0, %v736
    %v738 = vrot.slane %v733, %v737
    %v740 = vmul.f32 %v717, %v738
    %v741 = vmul.f32 %v718, %v738
    %v742 = vmul.f32 %v719, %v738
    %v743 = vmul.f32 %v720, %v738
    %v744 = vmul.f32 %v721, %v738
    %v745 = vmul.f32 %v722, %v738
    %v746 = vmul.f32 %v723, %v738
    %v747 = vmul.f32 %v724, %v738
    %v748 = vmul.f32 %v725, %v738
    %v749 = vmul.f32 %v726, %v738
    %v750 = vmul.f32 %v727, %v738
    %v751 = vmul.f32 %v728, %v738
    %v752 = vmul.f32 %v729, %v738
    %v753 = vmul.f32 %v730, %v738
    %v754 = vmul.f32 %v731, %v738
    %v755 = vmul.f32 %v732, %v738
    %v756 = vld [vmem:[%s7] sm:$0x1]
    %v758 = vlaneseq
    %v759 = vshrl.u32 %v758, 7
    %v760 = vsub.s32 0, %v759
    %v761 = vrot.slane %v756, %v760
    %v763 = vadd.f32 %v740, %v761
    %v764 = vadd.f32 %v741, %v761
    %v765 = vadd.f32 %v742, %v761
    %v766 = vadd.f32 %v743, %v761
    %v767 = vadd.f32 %v744, %v761
    %v768 = vadd.f32 %v745, %v761
    %v769 = vadd.f32 %v746, %v761
    %v770 = vadd.f32 %v747, %v761
    %v771 = vadd.f32 %v748, %v761
    %v772 = vadd.f32 %v749, %v761
    %v773 = vadd.f32 %v750, %v761
    %v774 = vadd.f32 %v751, %v761
    %v775 = vadd.f32 %v752, %v761
    %v776 = vadd.f32 %v753, %v761
    %v777 = vadd.f32 %v754, %v761
    %v778 = vadd.f32 %v755, %v761
    %779 = vst [vmem:[%s8] sm:$0xff] %v763
    %780 = vst [vmem:[%s8 + $0x8] sm:$0xff] %v764
    %781 = vst [vmem:[%s8 + $0x10] sm:$0xff] %v765
    %782 = vst [vmem:[%s8 + $0x18] sm:$0xff] %v766
    %783 = vst [vmem:[%s8 + $0x20] sm:$0xff] %v767
    %784 = vst [vmem:[%s8 + $0x28] sm:$0xff] %v768
    %785 = vst [vmem:[%s8 + $0x30] sm:$0xff] %v769
    %786 = vst [vmem:[%s8 + $0x38] sm:$0xff] %v770
    %787 = vst [vmem:[%s8 + $0x40] sm:$0xff] %v771
    %788 = vst [vmem:[%s8 + $0x48] sm:$0xff] %v772
    %789 = vst [vmem:[%s8 + $0x50] sm:$0xff] %v773
    %790 = vst [vmem:[%s8 + $0x58] sm:$0xff] %v774
    %791 = vst [vmem:[%s8 + $0x60] sm:$0xff] %v775
    %792 = vst [vmem:[%s8 + $0x68] sm:$0xff] %v776
    %793 = vst [vmem:[%s8 + $0x70] sm:$0xff] %v777
    %794 = vst [vmem:[%s8 + $0x78] sm:$0xff] %v778
    %v795 = vlaneseq
    %v796 = vand.u32 %v795, 127
    %vm797 = vcmp.lt.s32.totalorder %v796, 4
    %v798 = vsel %vm797, %v763, -inf
    %v799 = vsel %vm797, %v764, -inf
    %v800 = vsel %vm797, %v765, -inf
    %v801 = vsel %vm797, %v766, -inf
    %v802 = vsel %vm797, %v767, -inf
    %v803 = vsel %vm797, %v768, -inf
    %v804 = vsel %vm797, %v769, -inf
    %v805 = vsel %vm797, %v770, -inf
    %v806 = vsel %vm797, %v771, -inf
    %v807 = vsel %vm797, %v772, -inf
    %v808 = vsel %vm797, %v773, -inf
    %v809 = vsel %vm797, %v774, -inf
    %v810 = vsel %vm797, %v775, -inf
    %v811 = vsel %vm797, %v776, -inf
    %v812 = vsel %vm797, %v777, -inf
    %v813 = vsel %vm797, %v778, -inf
    %814 = vmax.xlane.f32.xlu0 %v798
    %v815 = vpop.xlane.xlu0 %814
    %816 = vmax.xlane.f32.xlu0 %v799
    %v817 = vpop.xlane.xlu0 %816
    %818 = vmax.xlane.f32.xlu0 %v800
    %v819 = vpop.xlane.xlu0 %818
    %820 = vmax.xlane.f32.xlu0 %v801
    %v821 = vpop.xlane.xlu0 %820
    %822 = vmax.xlane.f32.xlu0 %v802
    %v823 = vpop.xlane.xlu0 %822
    %824 = vmax.xlane.f32.xlu0 %v803
    %v825 = vpop.xlane.xlu0 %824
    %826 = vmax.xlane.f32.xlu0 %v804
    %v827 = vpop.xlane.xlu0 %826
    %828 = vmax.xlane.f32.xlu0 %v805
    %v829 = vpop.xlane.xlu0 %828
    %830 = vmax.xlane.f32.xlu0 %v806
    %v831 = vpop.xlane.xlu0 %830
    %832 = vmax.xlane.f32.xlu0 %v807
    %v833 = vpop.xlane.xlu0 %832
    %834 = vmax.xlane.f32.xlu0 %v808
    %v835 = vpop.xlane.xlu0 %834
    %836 = vmax.xlane.f32.xlu0 %v809
    %v837 = vpop.xlane.xlu0 %836
    %838 = vmax.xlane.f32.xlu0 %v810
    %v839 = vpop.xlane.xlu0 %838
    %840 = vmax.xlane.f32.xlu0 %v811
    %v841 = vpop.xlane.xlu0 %840
    %842 = vmax.xlane.f32.xlu0 %v812
    %v843 = vpop.xlane.xlu0 %842
    %844 = vmax.xlane.f32.xlu0 %v813
    %v845 = vpop.xlane.xlu0 %844
    %v846 = vsub.f32 %v798, %v815
    %v847 = vsub.f32 %v799, %v817
    %v848 = vsub.f32 %v800, %v819
    %v849 = vsub.f32 %v801, %v821
    %v850 = vsub.f32 %v802, %v823
    %v851 = vsub.f32 %v803, %v825
    %v852 = vsub.f32 %v804, %v827
    %v853 = vsub.f32 %v805, %v829
    %v854 = vsub.f32 %v806, %v831
    %v855 = vsub.f32 %v807, %v833
    %v856 = vsub.f32 %v808, %v835
    %v857 = vsub.f32 %v809, %v837
    %v858 = vsub.f32 %v810, %v839
    %v859 = vsub.f32 %v811, %v841
    %v860 = vsub.f32 %v812, %v843
    %v861 = vsub.f32 %v813, %v845
    %v862 = vmul.f32 %v846, 1.442695
    %v863 = vpow.pop %v862
    %v864 = vmul.f32 %v847, 1.442695
    %v865 = vpow.pop %v864
    %v866 = vmul.f32 %v848, 1.442695
    %v867 = vpow.pop %v866
    %v868 = vmul.f32 %v849, 1.442695
    %v869 = vpow.pop %v868
    %v870 = vmul.f32 %v850, 1.442695
    %v871 = vpow.pop %v870
    %v872 = vmul.f32 %v851, 1.442695
    %v873 = vpow.pop %v872
    %v874 = vmul.f32 %v852, 1.442695
    %v875 = vpow.pop %v874
    %v876 = vmul.f32 %v853, 1.442695
    %v877 = vpow.pop %v876
    %v878 = vmul.f32 %v854, 1.442695
    %v879 = vpow.pop %v878
    %v880 = vmul.f32 %v855, 1.442695
    %v881 = vpow.pop %v880
    %v882 = vmul.f32 %v856, 1.442695
    %v883 = vpow.pop %v882
    %v884 = vmul.f32 %v857, 1.442695
    %v885 = vpow.pop %v884
    %v886 = vmul.f32 %v858, 1.442695
    %v887 = vpow.pop %v886
    %v888 = vmul.f32 %v859, 1.442695
    %v889 = vpow.pop %v888
    %v890 = vmul.f32 %v860, 1.442695
    %v891 = vpow.pop %v890
    %v892 = vmul.f32 %v861, 1.442695
    %v893 = vpow.pop %v892
    %894 = vadd.xlane.f32.xlu0 %v863
    %v895 = vpop.xlane.xlu0 %894
    %896 = vadd.xlane.f32.xlu0 %v865
    %v897 = vpop.xlane.xlu0 %896
    %898 = vadd.xlane.f32.xlu0 %v867
    %v899 = vpop.xlane.xlu0 %898
    %900 = vadd.xlane.f32.xlu0 %v869
    %v901 = vpop.xlane.xlu0 %900
    %902 = vadd.xlane.f32.xlu0 %v871
    %v903 = vpop.xlane.xlu0 %902
    %904 = vadd.xlane.f32.xlu0 %v873
    %v905 = vpop.xlane.xlu0 %904
    %906 = vadd.xlane.f32.xlu0 %v875
    %v907 = vpop.xlane.xlu0 %906
    %908 = vadd.xlane.f32.xlu0 %v877
    %v909 = vpop.xlane.xlu0 %908
    %910 = vadd.xlane.f32.xlu0 %v879
    %v911 = vpop.xlane.xlu0 %910
    %912 = vadd.xlane.f32.xlu0 %v881
    %v913 = vpop.xlane.xlu0 %912
    %914 = vadd.xlane.f32.xlu0 %v883
    %v915 = vpop.xlane.xlu0 %914
    %916 = vadd.xlane.f32.xlu0 %v885
    %v917 = vpop.xlane.xlu0 %916
    %918 = vadd.xlane.f32.xlu0 %v887
    %v919 = vpop.xlane.xlu0 %918
    %920 = vadd.xlane.f32.xlu0 %v889
    %v921 = vpop.xlane.xlu0 %920
    %922 = vadd.xlane.f32.xlu0 %v891
    %v923 = vpop.xlane.xlu0 %922
    %924 = vadd.xlane.f32.xlu0 %v893
    %v925 = vpop.xlane.xlu0 %924
    %v926 = vlog2.pop %v895
    %v927 = vmul.f32 %v926, 0.6931472
    %v928 = vlog2.pop %v897
    %v929 = vmul.f32 %v928, 0.6931472
    %v930 = vlog2.pop %v899
    %v931 = vmul.f32 %v930, 0.6931472
    %v932 = vlog2.pop %v901
    %v933 = vmul.f32 %v932, 0.6931472
    %v934 = vlog2.pop %v903
    %v935 = vmul.f32 %v934, 0.6931472
    %v936 = vlog2.pop %v905
    %v937 = vmul.f32 %v936, 0.6931472
    %v938 = vlog2.pop %v907
    %v939 = vmul.f32 %v938, 0.6931472
    %v940 = vlog2.pop %v909
    %v941 = vmul.f32 %v940, 0.6931472
    %v942 = vlog2.pop %v911
    %v943 = vmul.f32 %v942, 0.6931472
    %v944 = vlog2.pop %v913
    %v945 = vmul.f32 %v944, 0.6931472
    %v946 = vlog2.pop %v915
    %v947 = vmul.f32 %v946, 0.6931472
    %v948 = vlog2.pop %v917
    %v949 = vmul.f32 %v948, 0.6931472
    %v950 = vlog2.pop %v919
    %v951 = vmul.f32 %v950, 0.6931472
    %v952 = vlog2.pop %v921
    %v953 = vmul.f32 %v952, 0.6931472
    %v954 = vlog2.pop %v923
    %v955 = vmul.f32 %v954, 0.6931472
    %v956 = vlog2.pop %v925
    %v957 = vmul.f32 %v956, 0.6931472
    %v958 = vadd.f32 %v927, %v815
    %v959 = vadd.f32 %v929, %v817
    %v960 = vadd.f32 %v931, %v819
    %v961 = vadd.f32 %v933, %v821
    %v962 = vadd.f32 %v935, %v823
    %v963 = vadd.f32 %v937, %v825
    %v964 = vadd.f32 %v939, %v827
    %v965 = vadd.f32 %v941, %v829
    %v966 = vadd.f32 %v943, %v831
    %v967 = vadd.f32 %v945, %v833
    %v968 = vadd.f32 %v947, %v835
    %v969 = vadd.f32 %v949, %v837
    %v970 = vadd.f32 %v951, %v839
    %v971 = vadd.f32 %v953, %v841
    %v972 = vadd.f32 %v955, %v843
    %v973 = vadd.f32 %v957, %v845
    %v974 = vsub.f32 %v763, %v958
    %v975 = vsub.f32 %v764, %v959
    %v976 = vsub.f32 %v765, %v960
    %v977 = vsub.f32 %v766, %v961
    %v978 = vsub.f32 %v767, %v962
    %v979 = vsub.f32 %v768, %v963
    %v980 = vsub.f32 %v769, %v964
    %v981 = vsub.f32 %v770, %v965
    %v982 = vsub.f32 %v771, %v966
    %v983 = vsub.f32 %v772, %v967
    %v984 = vsub.f32 %v773, %v968
    %v985 = vsub.f32 %v774, %v969
    %v986 = vsub.f32 %v775, %v970
    %v987 = vsub.f32 %v776, %v971
    %v988 = vsub.f32 %v777, %v972
    %v989 = vsub.f32 %v778, %v973
    %v990 = vsel %vm797, %v974, 0.0
    %v991 = vsel %vm797, %v975, 0.0
    %v992 = vsel %vm797, %v976, 0.0
    %v993 = vsel %vm797, %v977, 0.0
    %v994 = vsel %vm797, %v978, 0.0
    %v995 = vsel %vm797, %v979, 0.0
    %v996 = vsel %vm797, %v980, 0.0
    %v997 = vsel %vm797, %v981, 0.0
    %v998 = vsel %vm797, %v982, 0.0
    %v999 = vsel %vm797, %v983, 0.0
    %v1000 = vsel %vm797, %v984, 0.0
    %v1001 = vsel %vm797, %v985, 0.0
    %v1002 = vsel %vm797, %v986, 0.0
    %v1003 = vsel %vm797, %v987, 0.0
    %v1004 = vsel %vm797, %v988, 0.0
    %v1005 = vsel %vm797, %v989, 0.0
    %1006 = vst [vmem:[%s9] sm:$0xff] %v990
    %1007 = vst [vmem:[%s9 + $0x8] sm:$0xff] %v991
    %1008 = vst [vmem:[%s9 + $0x10] sm:$0xff] %v992
    %1009 = vst [vmem:[%s9 + $0x18] sm:$0xff] %v993
    %1010 = vst [vmem:[%s9 + $0x20] sm:$0xff] %v994
    %1011 = vst [vmem:[%s9 + $0x28] sm:$0xff] %v995
    %1012 = vst [vmem:[%s9 + $0x30] sm:$0xff] %v996
    %1013 = vst [vmem:[%s9 + $0x38] sm:$0xff] %v997
    %1014 = vst [vmem:[%s9 + $0x40] sm:$0xff] %v998
    %1015 = vst [vmem:[%s9 + $0x48] sm:$0xff] %v999
    %1016 = vst [vmem:[%s9 + $0x50] sm:$0xff] %v1000
    %1017 = vst [vmem:[%s9 + $0x58] sm:$0xff] %v1001
    %1018 = vst [vmem:[%s9 + $0x60] sm:$0xff] %v1002
    %1019 = vst [vmem:[%s9 + $0x68] sm:$0xff] %v1003
    %1020 = vst [vmem:[%s9 + $0x70] sm:$0xff] %v1004
    %1021 = vst [vmem:[%s9 + $0x78] sm:$0xff] %v1005
  $region41: #{gin_forward.3} parent=0 // pred_fallthru
    _
  // Predicated region
  $region42: #{gin_forward.3} parent=0 // pred_check
    _
  $region43: #{gin_forward.3} parent=0 // pred_check_branch
    %1023 = sbr.rel (0) target = $region45
  $region44: #{gin_forward.3} parent=0 // pred_region
    _
  $region45: #{gin_forward.3} parent=0 // pred_fallthru
    _
  // Predicated region
  $region46: #{gin_forward.3} parent=0 // pred_check
    _
  $region47: #{gin_forward.3} parent=0 // pred_check_branch
    %1025 = sbr.rel (0) target = $region49
  $region48: #{gin_forward.3} parent=0 // pred_region
    _
  $region49: #{gin_forward.3} parent=0 // pred_fallthru
    _
  // Predicated region
  $region50: #{gin_forward.3} parent=0 // pred_check
    _
  $region51: #{gin_forward.3} parent=0 // pred_check_branch
    %1027 = sbr.rel (0) target = $region53
  $region52: #{gin_forward.3} parent=0 // pred_region
    _
  $region53: #{gin_forward.3} parent=0 // pred_fallthru
    _
  // Predicated region
  $region54: #{gin_forward.3} parent=0 // pred_check
    _
  $region55: #{gin_forward.3} parent=0 // pred_check_branch
    %1029 = sbr.rel (0) target = $region57
  $region56: #{gin_forward.3} parent=0 // pred_region
    _
  $region57: #{gin_forward.3} parent=0 // pred_fallthru
    _

</llo_original>
